<compile_context>
chip_gen: v7x
topology: tpu7x:2x2x1
jax: 0.10.0
libtpu: 0.0.40
codegen_flags: <defaults>
</compile_context>

<pallas_src>
import functools
import math

import jax
import jax.numpy as jnp
from jax.experimental import pallas as pl
from jax.experimental.pallas import tpu as pltpu


def _block_kernel(x_ref, g1_ref, b1_ref, wqkv_ref, wproj_ref,
                  g2_ref, b2_ref, w1_ref, bm1_ref, w2_ref, bm2_ref,
                  o_ref, *, num_heads):
    Bt, N, C = x_ref.shape
    hd = C // num_heads
    scale = float(hd) ** 0.5        # matches Attention.scale (positive power)
    eps = 1e-5                      # PyTorch nn.LayerNorm default
    w_dt = wqkv_ref.dtype           # matmul compute dtype (bf16 if params are bf16)

    # Flatten the batch tile into the row dimension for all token-wise matmuls.
    x = x_ref[...].astype(jnp.float32).reshape(Bt * N, C)

    # ---------------- LayerNorm 1 (f32 elementwise) ----------------
    mu = jnp.mean(x, axis=-1, keepdims=True)
    var = jnp.mean((x - mu) ** 2, axis=-1, keepdims=True)       # biased var (torch LN)
    xn = (x - mu) * jax.lax.rsqrt(var + eps)
    xn = xn * g1_ref[0].astype(jnp.float32) + b1_ref[0].astype(jnp.float32)

    # ---------------- Attention ------------------------------------
    # One big (Bt*N, C) x (C, 3C) MXU matmul for QKV (no bias: qkv_bias=None).
    qkv = jnp.dot(xn.astype(w_dt), wqkv_ref[...],
                  preferred_element_type=jnp.float32)           # (Bt*N, 3C)
    qkv = qkv.reshape(Bt, N, 3 * C)                             # leading-dim split only

    attn_out = jnp.zeros((Bt * N, C), jnp.float32)
    for h in range(num_heads):                                  # static unrolled loop
        lo = h * hd
        qh = qkv[:, :, lo:lo + hd] * scale                      # fold scale into q
        kh = qkv[:, :, C + lo:C + lo + hd]
        vh = qkv[:, :, 2 * C + lo:2 * C + lo + hd]
        # Batched over the batch tile: (Bt, N, hd) x (Bt, N, hd) -> (Bt, N, N)
        s = jnp.einsum('bnd,bmd->bnm', qh, kh,
                       preferred_element_type=jnp.float32)
        s = s - jnp.max(s, axis=-1, keepdims=True)
        p = jnp.exp(s)
        p = p * pl.reciprocal(jnp.sum(p, axis=-1, keepdims=True), approx=True)
        ctx = jnp.einsum('bnm,bmd->bnd',
                         p.astype(w_dt), vh.astype(w_dt),
                         preferred_element_type=jnp.float32)    # (Bt, N, hd)
        # Accumulate straight into the projection (no lane-axis concat).
        attn_out = attn_out + jnp.dot(
            ctx.reshape(Bt * N, hd).astype(w_dt),
            wproj_ref[pl.ds(lo, hd), :],
            preferred_element_type=jnp.float32)                 # (Bt*N, C)

    x1 = x + attn_out                       # first residual (drop_path = Identity)

    # ---------------- LayerNorm 2 ----------------------------------
    mu2 = jnp.mean(x1, axis=-1, keepdims=True)
    var2 = jnp.mean((x1 - mu2) ** 2, axis=-1, keepdims=True)
    x2n = (x1 - mu2) * jax.lax.rsqrt(var2 + eps)
    x2n = x2n * g2_ref[0].astype(jnp.float32) + b2_ref[0].astype(jnp.float32)

    # ---------------- Mlp -------------------------------------------
    h1 = jnp.dot(x2n.astype(w_dt), w1_ref[...],
                 preferred_element_type=jnp.float32) + bm1_ref[0].astype(jnp.float32)
    h1 = 0.5 * h1 * (1.0 + jax.lax.erf(h1 / math.sqrt(2.0)))    # exact GELU (nn.GELU)
    h2 = jnp.dot(h1.astype(w_dt), w2_ref[...],
                 preferred_element_type=jnp.float32) + bm2_ref[0].astype(jnp.float32)

    o_ref[...] = (x1 + h2).reshape(Bt, N, C).astype(o_ref.dtype)  # second residual


def _pick_batch_tile(B, want):
    """Largest divisor of B that is <= want (keeps the grid exact, no ragged tail)."""
    bt = max(1, min(B, want))
    while B % bt:
        bt -= 1
    return bt


def vit_block(x, params, num_heads, batch_tile=8):
    B, N, C = x.shape
    assert C % num_heads == 0
    hidden = params["w1"].shape[1]
    bt = _pick_batch_tile(B, batch_tile)

    def wspec(shape):
        # Constant index_map -> the block is fetched once and reused every step.
        return pl.BlockSpec(shape, lambda b: (0,) * len(shape))

    in_specs = [
        pl.BlockSpec((bt, N, C), lambda b: (b, 0, 0)),   # x (batch-tiled)
        wspec((1, C)), wspec((1, C)),                    # norm1 gamma / beta
        wspec((C, 3 * C)),                               # qkv weight (in, out)
        wspec((C, C)),                                   # proj weight
        wspec((1, C)), wspec((1, C)),                    # norm2 gamma / beta
        wspec((C, hidden)), wspec((1, hidden)),          # fc1 weight / bias
        wspec((hidden, C)), wspec((1, C)),               # fc2 weight / bias
    ]

    return pl.pallas_call(
        functools.partial(_block_kernel, num_heads=num_heads),
        out_shape=jax.ShapeDtypeStruct((B, N, C), x.dtype),
        grid=(B // bt,),
        in_specs=in_specs,
        out_specs=pl.BlockSpec((bt, N, C), lambda b: (b, 0, 0)),
        compiler_params=pltpu.CompilerParams(
            dimension_semantics=("parallel",)),          # batch tiles split across TCs
    )(x, params["g1"], params["b1"], params["wqkv"], params["wproj"],
      params["g2"], params["b2"], params["w1"], params["bm1"],
      params["w2"], params["bm2"])


def vit_block_reference(x, params, num_heads):
    """Pure-JAX reference mirroring the PyTorch forward (eval mode)."""
    B, N, C = x.shape
    hd = C // num_heads
    scale = hd ** 0.5

    def ln(v, g, b):
        mu = jnp.mean(v, axis=-1, keepdims=True)
        var = jnp.mean((v - mu) ** 2, axis=-1, keepdims=True)
        return (v - mu) / jnp.sqrt(var + 1e-5) * g + b

    xn = ln(x, params["g1"][0], params["b1"][0])
    qkv = (xn @ params["wqkv"]).reshape(B, N, 3, num_heads, hd).transpose(2, 0, 3, 1, 4)
    q, k, v = qkv[0], qkv[1], qkv[2]
    attn = jnp.einsum("bhnd,bhmd->bhnm", q, k) * scale
    attn = jax.nn.softmax(attn, axis=-1)
    out = jnp.einsum("bhnm,bhmd->bhnd", attn, v).transpose(0, 2, 1, 3).reshape(B, N, C)
    out = out @ params["wproj"]
    x1 = x + out

    x2n = ln(x1, params["g2"][0], params["b2"][0])
    h1 = jax.nn.gelu(x2n @ params["w1"] + params["bm1"][0], approximate=False)
    h2 = h1 @ params["w2"] + params["bm2"][0]
    return x1 + h2


if __name__ == "__main__":
    B, N, C = 4, 8, 32
    num_heads = 4
    hidden = int(C * 0.5)   # hidden_features = int(dim * 0.5)

    key = jax.random.PRNGKey(0)
    keys = jax.random.split(key, 12)

    params = {
        "g1": 1.0 + 0.02 * jax.random.normal(keys[0], (1, C), jnp.float32),
        "b1": 0.02 * jax.random.normal(keys[1], (1, C), jnp.float32),
        "wqkv": 0.05 * jax.random.normal(keys[2], (C, 3 * C), jnp.float32),
        "wproj": 0.05 * jax.random.normal(keys[3], (C, C), jnp.float32),
        "g2": 1.0 + 0.02 * jax.random.normal(keys[4], (1, C), jnp.float32),
        "b2": 0.02 * jax.random.normal(keys[5], (1, C), jnp.float32),
        "w1": 0.05 * jax.random.normal(keys[6], (C, hidden), jnp.float32),
        "bm1": 0.02 * jax.random.normal(keys[7], (1, hidden), jnp.float32),
        "w2": 0.05 * jax.random.normal(keys[8], (hidden, C), jnp.float32),
        "bm2": 0.02 * jax.random.normal(keys[9], (1, C), jnp.float32),
    }
    x = jax.random.normal(keys[10], (B, N, C), jnp.float32)

    y = vit_block(x, params, num_heads, batch_tile=2)   # grid = (2,), 2 batch elems/step
    y = jax.block_until_ready(y)

    y_ref = vit_block_reference(x, params, num_heads)
    assert y.shape == (B, N, C)
    assert jnp.allclose(y, y_ref, atol=1e-2, rtol=1e-2), "mismatch vs pure-JAX reference"

    print("KERNEL_OK")
</pallas_src>

<mosaic_0001>
module attributes {stable_mosaic.version = 11 : i64} {
  func.func @_block_kernel(%arg0: i32, %arg1: memref<2x8x32xf32, #tpu.memory_space<vmem>>, %arg2: memref<1x32xf32, #tpu.memory_space<vmem>>, %arg3: memref<1x32xf32, #tpu.memory_space<vmem>>, %arg4: memref<32x96xf32, #tpu.memory_space<vmem>>, %arg5: memref<32x32xf32, #tpu.memory_space<vmem>>, %arg6: memref<1x32xf32, #tpu.memory_space<vmem>>, %arg7: memref<1x32xf32, #tpu.memory_space<vmem>>, %arg8: memref<32x16xf32, #tpu.memory_space<vmem>>, %arg9: memref<1x16xf32, #tpu.memory_space<vmem>>, %arg10: memref<16x32xf32, #tpu.memory_space<vmem>>, %arg11: memref<1x32xf32, #tpu.memory_space<vmem>>, %arg12: memref<2x8x32xf32, #tpu.memory_space<vmem>>) attributes {dimension_semantics = [#tpu.dimension_semantics<parallel>], iteration_bounds = array<i64: 2>, scalar_prefetch = 0 : i64, scratch_operands = 0 : i64, tpu.core_type = #tpu.core_type<tc>, window_params = [{transform_indices = @transform_0, window_bounds = array<i64: 2, 8, 32>}, {pipeline_mode = #tpu.pipeline_mode<synchronous>, transform_indices = @transform_1, window_bounds = array<i64: 1, 32>}, {pipeline_mode = #tpu.pipeline_mode<synchronous>, transform_indices = @transform_2, window_bounds = array<i64: 1, 32>}, {pipeline_mode = #tpu.pipeline_mode<synchronous>, transform_indices = @transform_3, window_bounds = array<i64: 32, 96>}, {pipeline_mode = #tpu.pipeline_mode<synchronous>, transform_indices = @transform_4, window_bounds = array<i64: 32, 32>}, {pipeline_mode = #tpu.pipeline_mode<synchronous>, transform_indices = @transform_5, window_bounds = array<i64: 1, 32>}, {pipeline_mode = #tpu.pipeline_mode<synchronous>, transform_indices = @transform_6, window_bounds = array<i64: 1, 32>}, {pipeline_mode = #tpu.pipeline_mode<synchronous>, transform_indices = @transform_7, window_bounds = array<i64: 32, 16>}, {pipeline_mode = #tpu.pipeline_mode<synchronous>, transform_indices = @transform_8, window_bounds = array<i64: 1, 16>}, {pipeline_mode = #tpu.pipeline_mode<synchronous>, transform_indices = @transform_9, window_bounds = array<i64: 16, 32>}, {pipeline_mode = #tpu.pipeline_mode<synchronous>, transform_indices = @transform_10, window_bounds = array<i64: 1, 32>}, {transform_indices = @transform_11, window_bounds = array<i64: 2, 8, 32>}]} {
    %c0 = arith.constant 0 : index
    %c0_0 = arith.constant 0 : index
    %c0_1 = arith.constant 0 : index
    %0 = vector.load %arg1[%c0, %c0_0, %c0_1] : memref<2x8x32xf32, #tpu.memory_space<vmem>>, vector<2x8x32xf32>
    %1 = vector.shape_cast %0 : vector<2x8x32xf32> to vector<16x32xf32>
    %cst = arith.constant dense<0.000000e+00> : vector<16xf32>
    %2 = vector.multi_reduction <add>, %1, %cst [1] : vector<16x32xf32> to vector<16xf32>
    %3 = vector.shape_cast %2 : vector<16xf32> to vector<16x1xf32>
    %cst_2 = arith.constant 3.200000e+01 : f32
    %4 = vector.broadcast %cst_2 : f32 to vector<16x1xf32>
    %5 = arith.divf %3, %4 : vector<16x1xf32>
    %6 = vector.broadcast %5 : vector<16x1xf32> to vector<16x32xf32>
    %7 = arith.subf %1, %6 : vector<16x32xf32>
    %8 = arith.mulf %7, %7 : vector<16x32xf32>
    %cst_3 = arith.constant dense<0.000000e+00> : vector<16xf32>
    %9 = vector.multi_reduction <add>, %8, %cst_3 [1] : vector<16x32xf32> to vector<16xf32>
    %10 = vector.shape_cast %9 : vector<16xf32> to vector<16x1xf32>
    %cst_4 = arith.constant 3.200000e+01 : f32
    %11 = vector.broadcast %cst_4 : f32 to vector<16x1xf32>
    %12 = arith.divf %10, %11 : vector<16x1xf32>
    %13 = vector.broadcast %5 : vector<16x1xf32> to vector<16x32xf32>
    %14 = arith.subf %1, %13 : vector<16x32xf32>
    %cst_5 = arith.constant 9.99999974E-6 : f32
    %15 = vector.broadcast %cst_5 : f32 to vector<16x1xf32>
    %16 = arith.addf %12, %15 : vector<16x1xf32>
    %17 = math.rsqrt %16 : vector<16x1xf32>
    %18 = vector.broadcast %17 : vector<16x1xf32> to vector<16x32xf32>
    %19 = arith.mulf %14, %18 : vector<16x32xf32>
    %c0_6 = arith.constant 0 : index
    %c0_7 = arith.constant 0 : index
    %20 = vector.load %arg2[%c0_6, %c0_7] : memref<1x32xf32, #tpu.memory_space<vmem>>, vector<1x32xf32>
    %21 = vector.shape_cast %20 : vector<1x32xf32> to vector<32xf32>
    %22 = vector.shape_cast %21 : vector<32xf32> to vector<1x32xf32>
    %23 = vector.broadcast %22 : vector<1x32xf32> to vector<16x32xf32>
    %24 = arith.mulf %19, %23 : vector<16x32xf32>
    %c0_8 = arith.constant 0 : index
    %c0_9 = arith.constant 0 : index
    %25 = vector.load %arg3[%c0_8, %c0_9] : memref<1x32xf32, #tpu.memory_space<vmem>>, vector<1x32xf32>
    %26 = vector.shape_cast %25 : vector<1x32xf32> to vector<32xf32>
    %27 = vector.shape_cast %26 : vector<32xf32> to vector<1x32xf32>
    %28 = vector.broadcast %27 : vector<1x32xf32> to vector<16x32xf32>
    %29 = arith.addf %24, %28 : vector<16x32xf32>
    %c0_10 = arith.constant 0 : index
    %c0_11 = arith.constant 0 : index
    %30 = vector.load %arg4[%c0_10, %c0_11] : memref<32x96xf32, #tpu.memory_space<vmem>>, vector<32x96xf32>
    %cst_12 = arith.constant dense<0.000000e+00> : vector<16x96xf32>
    %31 = tpu.matmul %29, %30, %cst_12 {dimension_numbers = #tpu.dot_dimension_numbers<[1], [0], [0], [1], [0, 0, 1, 1], [], []>} : vector<16x32xf32>, vector<32x96xf32>, vector<16x96xf32> -> vector<16x96xf32>
    %32 = vector.shape_cast %31 : vector<16x96xf32> to vector<2x8x96xf32>
    %cst_13 = arith.constant 0.000000e+00 : f32
    %33 = vector.broadcast %cst_13 : f32 to vector<16x32xf32>
    %34 = vector.extract_strided_slice %32 {offsets = [0, 0, 0], sizes = [2, 8, 8], strides = [1, 1, 1]} : vector<2x8x96xf32> to vector<2x8x8xf32>
    %cst_14 = arith.constant 2.82842708 : f32
    %35 = vector.broadcast %cst_14 : f32 to vector<2x8x8xf32>
    %36 = arith.mulf %34, %35 : vector<2x8x8xf32>
    %37 = vector.extract_strided_slice %32 {offsets = [0, 0, 32], sizes = [2, 8, 8], strides = [1, 1, 1]} : vector<2x8x96xf32> to vector<2x8x8xf32>
    %38 = vector.extract_strided_slice %32 {offsets = [0, 0, 64], sizes = [2, 8, 8], strides = [1, 1, 1]} : vector<2x8x96xf32> to vector<2x8x8xf32>
    "tpu.trace_start"() <{level = 10 : i32, message = "bnd,bmd->bnm"}> : () -> ()
    %cst_15 = arith.constant dense<0.000000e+00> : vector<2x8x8xf32>
    %39 = tpu.matmul %36, %37, %cst_15 {dimension_numbers = #tpu.dot_dimension_numbers<[2], [2], [1], [1], [0, 0, 0, 1, 1, 1], [0], [0]>} : vector<2x8x8xf32>, vector<2x8x8xf32>, vector<2x8x8xf32> -> vector<2x8x8xf32>
    "tpu.trace_stop"() : () -> ()
    %cst_16 = arith.constant dense<0xFF800000> : vector<2x8xf32>
    %40 = vector.multi_reduction <maximumf>, %39, %cst_16 [2] : vector<2x8x8xf32> to vector<2x8xf32>
    %41 = vector.shape_cast %40 : vector<2x8xf32> to vector<2x8x1xf32>
    %42 = vector.broadcast %41 : vector<2x8x1xf32> to vector<2x8x8xf32>
    %43 = arith.subf %39, %42 : vector<2x8x8xf32>
    %44 = math.exp %43 : vector<2x8x8xf32>
    %cst_17 = arith.constant dense<0.000000e+00> : vector<2x8xf32>
    %45 = vector.multi_reduction <add>, %44, %cst_17 [2] : vector<2x8x8xf32> to vector<2x8xf32>
    %46 = vector.shape_cast %45 : vector<2x8xf32> to vector<2x8x1xf32>
    %47 = tpu.reciprocal %46 {approx = true} : vector<2x8x1xf32> -> vector<2x8x1xf32>
    %48 = vector.broadcast %47 : vector<2x8x1xf32> to vector<2x8x8xf32>
    %49 = arith.mulf %44, %48 : vector<2x8x8xf32>
    "tpu.trace_start"() <{level = 10 : i32, message = "bnm,bmd->bnd"}> : () -> ()
    %cst_18 = arith.constant dense<0.000000e+00> : vector<2x8x8xf32>
    %50 = tpu.matmul %49, %38, %cst_18 {dimension_numbers = #tpu.dot_dimension_numbers<[2], [1], [1], [2], [0, 0, 0, 1, 1, 2], [0], [0]>} : vector<2x8x8xf32>, vector<2x8x8xf32>, vector<2x8x8xf32> -> vector<2x8x8xf32>
    "tpu.trace_stop"() : () -> ()
    %51 = vector.shape_cast %50 : vector<2x8x8xf32> to vector<16x8xf32>
    %c0_19 = arith.constant 0 : index
    %c0_20 = arith.constant 0 : index
    %52 = vector.load %arg5[%c0_19, %c0_20] : memref<32x32xf32, #tpu.memory_space<vmem>>, vector<8x32xf32>
    %cst_21 = arith.constant dense<0.000000e+00> : vector<16x32xf32>
    %53 = tpu.matmul %51, %52, %cst_21 {dimension_numbers = #tpu.dot_dimension_numbers<[1], [0], [0], [1], [0, 0, 1, 1], [], []>} : vector<16x8xf32>, vector<8x32xf32>, vector<16x32xf32> -> vector<16x32xf32>
    %54 = arith.addf %33, %53 : vector<16x32xf32>
    %55 = vector.extract_strided_slice %32 {offsets = [0, 0, 8], sizes = [2, 8, 8], strides = [1, 1, 1]} : vector<2x8x96xf32> to vector<2x8x8xf32>
    %cst_22 = arith.constant 2.82842708 : f32
    %56 = vector.broadcast %cst_22 : f32 to vector<2x8x8xf32>
    %57 = arith.mulf %55, %56 : vector<2x8x8xf32>
    %58 = vector.extract_strided_slice %32 {offsets = [0, 0, 40], sizes = [2, 8, 8], strides = [1, 1, 1]} : vector<2x8x96xf32> to vector<2x8x8xf32>
    %59 = vector.extract_strided_slice %32 {offsets = [0, 0, 72], sizes = [2, 8, 8], strides = [1, 1, 1]} : vector<2x8x96xf32> to vector<2x8x8xf32>
    "tpu.trace_start"() <{level = 10 : i32, message = "bnd,bmd->bnm"}> : () -> ()
    %cst_23 = arith.constant dense<0.000000e+00> : vector<2x8x8xf32>
    %60 = tpu.matmul %57, %58, %cst_23 {dimension_numbers = #tpu.dot_dimension_numbers<[2], [2], [1], [1], [0, 0, 0, 1, 1, 1], [0], [0]>} : vector<2x8x8xf32>, vector<2x8x8xf32>, vector<2x8x8xf32> -> vector<2x8x8xf32>
    "tpu.trace_stop"() : () -> ()
    %cst_24 = arith.constant dense<0xFF800000> : vector<2x8xf32>
    %61 = vector.multi_reduction <maximumf>, %60, %cst_24 [2] : vector<2x8x8xf32> to vector<2x8xf32>
    %62 = vector.shape_cast %61 : vector<2x8xf32> to vector<2x8x1xf32>
    %63 = vector.broadcast %62 : vector<2x8x1xf32> to vector<2x8x8xf32>
    %64 = arith.subf %60, %63 : vector<2x8x8xf32>
    %65 = math.exp %64 : vector<2x8x8xf32>
    %cst_25 = arith.constant dense<0.000000e+00> : vector<2x8xf32>
    %66 = vector.multi_reduction <add>, %65, %cst_25 [2] : vector<2x8x8xf32> to vector<2x8xf32>
    %67 = vector.shape_cast %66 : vector<2x8xf32> to vector<2x8x1xf32>
    %68 = tpu.reciprocal %67 {approx = true} : vector<2x8x1xf32> -> vector<2x8x1xf32>
    %69 = vector.broadcast %68 : vector<2x8x1xf32> to vector<2x8x8xf32>
    %70 = arith.mulf %65, %69 : vector<2x8x8xf32>
    "tpu.trace_start"() <{level = 10 : i32, message = "bnm,bmd->bnd"}> : () -> ()
    %cst_26 = arith.constant dense<0.000000e+00> : vector<2x8x8xf32>
    %71 = tpu.matmul %70, %59, %cst_26 {dimension_numbers = #tpu.dot_dimension_numbers<[2], [1], [1], [2], [0, 0, 0, 1, 1, 2], [0], [0]>} : vector<2x8x8xf32>, vector<2x8x8xf32>, vector<2x8x8xf32> -> vector<2x8x8xf32>
    "tpu.trace_stop"() : () -> ()
    %72 = vector.shape_cast %71 : vector<2x8x8xf32> to vector<16x8xf32>
    %c8 = arith.constant 8 : index
    %c0_27 = arith.constant 0 : index
    %73 = vector.load %arg5[%c8, %c0_27] : memref<32x32xf32, #tpu.memory_space<vmem>>, vector<8x32xf32>
    %cst_28 = arith.constant dense<0.000000e+00> : vector<16x32xf32>
    %74 = tpu.matmul %72, %73, %cst_28 {dimension_numbers = #tpu.dot_dimension_numbers<[1], [0], [0], [1], [0, 0, 1, 1], [], []>} : vector<16x8xf32>, vector<8x32xf32>, vector<16x32xf32> -> vector<16x32xf32>
    %75 = arith.addf %54, %74 : vector<16x32xf32>
    %76 = vector.extract_strided_slice %32 {offsets = [0, 0, 16], sizes = [2, 8, 8], strides = [1, 1, 1]} : vector<2x8x96xf32> to vector<2x8x8xf32>
    %cst_29 = arith.constant 2.82842708 : f32
    %77 = vector.broadcast %cst_29 : f32 to vector<2x8x8xf32>
    %78 = arith.mulf %76, %77 : vector<2x8x8xf32>
    %79 = vector.extract_strided_slice %32 {offsets = [0, 0, 48], sizes = [2, 8, 8], strides = [1, 1, 1]} : vector<2x8x96xf32> to vector<2x8x8xf32>
    %80 = vector.extract_strided_slice %32 {offsets = [0, 0, 80], sizes = [2, 8, 8], strides = [1, 1, 1]} : vector<2x8x96xf32> to vector<2x8x8xf32>
    "tpu.trace_start"() <{level = 10 : i32, message = "bnd,bmd->bnm"}> : () -> ()
    %cst_30 = arith.constant dense<0.000000e+00> : vector<2x8x8xf32>
    %81 = tpu.matmul %78, %79, %cst_30 {dimension_numbers = #tpu.dot_dimension_numbers<[2], [2], [1], [1], [0, 0, 0, 1, 1, 1], [0], [0]>} : vector<2x8x8xf32>, vector<2x8x8xf32>, vector<2x8x8xf32> -> vector<2x8x8xf32>
    "tpu.trace_stop"() : () -> ()
    %cst_31 = arith.constant dense<0xFF800000> : vector<2x8xf32>
    %82 = vector.multi_reduction <maximumf>, %81, %cst_31 [2] : vector<2x8x8xf32> to vector<2x8xf32>
    %83 = vector.shape_cast %82 : vector<2x8xf32> to vector<2x8x1xf32>
    %84 = vector.broadcast %83 : vector<2x8x1xf32> to vector<2x8x8xf32>
    %85 = arith.subf %81, %84 : vector<2x8x8xf32>
    %86 = math.exp %85 : vector<2x8x8xf32>
    %cst_32 = arith.constant dense<0.000000e+00> : vector<2x8xf32>
    %87 = vector.multi_reduction <add>, %86, %cst_32 [2] : vector<2x8x8xf32> to vector<2x8xf32>
    %88 = vector.shape_cast %87 : vector<2x8xf32> to vector<2x8x1xf32>
    %89 = tpu.reciprocal %88 {approx = true} : vector<2x8x1xf32> -> vector<2x8x1xf32>
    %90 = vector.broadcast %89 : vector<2x8x1xf32> to vector<2x8x8xf32>
    %91 = arith.mulf %86, %90 : vector<2x8x8xf32>
    "tpu.trace_start"() <{level = 10 : i32, message = "bnm,bmd->bnd"}> : () -> ()
    %cst_33 = arith.constant dense<0.000000e+00> : vector<2x8x8xf32>
    %92 = tpu.matmul %91, %80, %cst_33 {dimension_numbers = #tpu.dot_dimension_numbers<[2], [1], [1], [2], [0, 0, 0, 1, 1, 2], [0], [0]>} : vector<2x8x8xf32>, vector<2x8x8xf32>, vector<2x8x8xf32> -> vector<2x8x8xf32>
    "tpu.trace_stop"() : () -> ()
    %93 = vector.shape_cast %92 : vector<2x8x8xf32> to vector<16x8xf32>
    %c16 = arith.constant 16 : index
    %c0_34 = arith.constant 0 : index
    %94 = vector.load %arg5[%c16, %c0_34] : memref<32x32xf32, #tpu.memory_space<vmem>>, vector<8x32xf32>
    %cst_35 = arith.constant dense<0.000000e+00> : vector<16x32xf32>
    %95 = tpu.matmul %93, %94, %cst_35 {dimension_numbers = #tpu.dot_dimension_numbers<[1], [0], [0], [1], [0, 0, 1, 1], [], []>} : vector<16x8xf32>, vector<8x32xf32>, vector<16x32xf32> -> vector<16x32xf32>
    %96 = arith.addf %75, %95 : vector<16x32xf32>
    %97 = vector.extract_strided_slice %32 {offsets = [0, 0, 24], sizes = [2, 8, 8], strides = [1, 1, 1]} : vector<2x8x96xf32> to vector<2x8x8xf32>
    %cst_36 = arith.constant 2.82842708 : f32
    %98 = vector.broadcast %cst_36 : f32 to vector<2x8x8xf32>
    %99 = arith.mulf %97, %98 : vector<2x8x8xf32>
    %100 = vector.extract_strided_slice %32 {offsets = [0, 0, 56], sizes = [2, 8, 8], strides = [1, 1, 1]} : vector<2x8x96xf32> to vector<2x8x8xf32>
    %101 = vector.extract_strided_slice %32 {offsets = [0, 0, 88], sizes = [2, 8, 8], strides = [1, 1, 1]} : vector<2x8x96xf32> to vector<2x8x8xf32>
    "tpu.trace_start"() <{level = 10 : i32, message = "bnd,bmd->bnm"}> : () -> ()
    %cst_37 = arith.constant dense<0.000000e+00> : vector<2x8x8xf32>
    %102 = tpu.matmul %99, %100, %cst_37 {dimension_numbers = #tpu.dot_dimension_numbers<[2], [2], [1], [1], [0, 0, 0, 1, 1, 1], [0], [0]>} : vector<2x8x8xf32>, vector<2x8x8xf32>, vector<2x8x8xf32> -> vector<2x8x8xf32>
    "tpu.trace_stop"() : () -> ()
    %cst_38 = arith.constant dense<0xFF800000> : vector<2x8xf32>
    %103 = vector.multi_reduction <maximumf>, %102, %cst_38 [2] : vector<2x8x8xf32> to vector<2x8xf32>
    %104 = vector.shape_cast %103 : vector<2x8xf32> to vector<2x8x1xf32>
    %105 = vector.broadcast %104 : vector<2x8x1xf32> to vector<2x8x8xf32>
    %106 = arith.subf %102, %105 : vector<2x8x8xf32>
    %107 = math.exp %106 : vector<2x8x8xf32>
    %cst_39 = arith.constant dense<0.000000e+00> : vector<2x8xf32>
    %108 = vector.multi_reduction <add>, %107, %cst_39 [2] : vector<2x8x8xf32> to vector<2x8xf32>
    %109 = vector.shape_cast %108 : vector<2x8xf32> to vector<2x8x1xf32>
    %110 = tpu.reciprocal %109 {approx = true} : vector<2x8x1xf32> -> vector<2x8x1xf32>
    %111 = vector.broadcast %110 : vector<2x8x1xf32> to vector<2x8x8xf32>
    %112 = arith.mulf %107, %111 : vector<2x8x8xf32>
    "tpu.trace_start"() <{level = 10 : i32, message = "bnm,bmd->bnd"}> : () -> ()
    %cst_40 = arith.constant dense<0.000000e+00> : vector<2x8x8xf32>
    %113 = tpu.matmul %112, %101, %cst_40 {dimension_numbers = #tpu.dot_dimension_numbers<[2], [1], [1], [2], [0, 0, 0, 1, 1, 2], [0], [0]>} : vector<2x8x8xf32>, vector<2x8x8xf32>, vector<2x8x8xf32> -> vector<2x8x8xf32>
    "tpu.trace_stop"() : () -> ()
    %114 = vector.shape_cast %113 : vector<2x8x8xf32> to vector<16x8xf32>
    %c24 = arith.constant 24 : index
    %c0_41 = arith.constant 0 : index
    %115 = vector.load %arg5[%c24, %c0_41] : memref<32x32xf32, #tpu.memory_space<vmem>>, vector<8x32xf32>
    %cst_42 = arith.constant dense<0.000000e+00> : vector<16x32xf32>
    %116 = tpu.matmul %114, %115, %cst_42 {dimension_numbers = #tpu.dot_dimension_numbers<[1], [0], [0], [1], [0, 0, 1, 1], [], []>} : vector<16x8xf32>, vector<8x32xf32>, vector<16x32xf32> -> vector<16x32xf32>
    %117 = arith.addf %96, %116 : vector<16x32xf32>
    %118 = arith.addf %1, %117 : vector<16x32xf32>
    %cst_43 = arith.constant dense<0.000000e+00> : vector<16xf32>
    %119 = vector.multi_reduction <add>, %118, %cst_43 [1] : vector<16x32xf32> to vector<16xf32>
    %120 = vector.shape_cast %119 : vector<16xf32> to vector<16x1xf32>
    %cst_44 = arith.constant 3.200000e+01 : f32
    %121 = vector.broadcast %cst_44 : f32 to vector<16x1xf32>
    %122 = arith.divf %120, %121 : vector<16x1xf32>
    %123 = vector.broadcast %122 : vector<16x1xf32> to vector<16x32xf32>
    %124 = arith.subf %118, %123 : vector<16x32xf32>
    %125 = arith.mulf %124, %124 : vector<16x32xf32>
    %cst_45 = arith.constant dense<0.000000e+00> : vector<16xf32>
    %126 = vector.multi_reduction <add>, %125, %cst_45 [1] : vector<16x32xf32> to vector<16xf32>
    %127 = vector.shape_cast %126 : vector<16xf32> to vector<16x1xf32>
    %cst_46 = arith.constant 3.200000e+01 : f32
    %128 = vector.broadcast %cst_46 : f32 to vector<16x1xf32>
    %129 = arith.divf %127, %128 : vector<16x1xf32>
    %130 = vector.broadcast %122 : vector<16x1xf32> to vector<16x32xf32>
    %131 = arith.subf %118, %130 : vector<16x32xf32>
    %cst_47 = arith.constant 9.99999974E-6 : f32
    %132 = vector.broadcast %cst_47 : f32 to vector<16x1xf32>
    %133 = arith.addf %129, %132 : vector<16x1xf32>
    %134 = math.rsqrt %133 : vector<16x1xf32>
    %135 = vector.broadcast %134 : vector<16x1xf32> to vector<16x32xf32>
    %136 = arith.mulf %131, %135 : vector<16x32xf32>
    %c0_48 = arith.constant 0 : index
    %c0_49 = arith.constant 0 : index
    %137 = vector.load %arg6[%c0_48, %c0_49] : memref<1x32xf32, #tpu.memory_space<vmem>>, vector<1x32xf32>
    %138 = vector.shape_cast %137 : vector<1x32xf32> to vector<32xf32>
    %139 = vector.shape_cast %138 : vector<32xf32> to vector<1x32xf32>
    %140 = vector.broadcast %139 : vector<1x32xf32> to vector<16x32xf32>
    %141 = arith.mulf %136, %140 : vector<16x32xf32>
    %c0_50 = arith.constant 0 : index
    %c0_51 = arith.constant 0 : index
    %142 = vector.load %arg7[%c0_50, %c0_51] : memref<1x32xf32, #tpu.memory_space<vmem>>, vector<1x32xf32>
    %143 = vector.shape_cast %142 : vector<1x32xf32> to vector<32xf32>
    %144 = vector.shape_cast %143 : vector<32xf32> to vector<1x32xf32>
    %145 = vector.broadcast %144 : vector<1x32xf32> to vector<16x32xf32>
    %146 = arith.addf %141, %145 : vector<16x32xf32>
    %c0_52 = arith.constant 0 : index
    %c0_53 = arith.constant 0 : index
    %147 = vector.load %arg8[%c0_52, %c0_53] : memref<32x16xf32, #tpu.memory_space<vmem>>, vector<32x16xf32>
    %cst_54 = arith.constant dense<0.000000e+00> : vector<16x16xf32>
    %148 = tpu.matmul %146, %147, %cst_54 {dimension_numbers = #tpu.dot_dimension_numbers<[1], [0], [0], [1], [0, 0, 1, 1], [], []>} : vector<16x32xf32>, vector<32x16xf32>, vector<16x16xf32> -> vector<16x16xf32>
    %c0_55 = arith.constant 0 : index
    %c0_56 = arith.constant 0 : index
    %149 = vector.load %arg9[%c0_55, %c0_56] : memref<1x16xf32, #tpu.memory_space<vmem>>, vector<1x16xf32>
    %150 = vector.shape_cast %149 : vector<1x16xf32> to vector<16xf32>
    %151 = vector.shape_cast %150 : vector<16xf32> to vector<1x16xf32>
    %152 = vector.broadcast %151 : vector<1x16xf32> to vector<16x16xf32>
    %153 = arith.addf %148, %152 : vector<16x16xf32>
    %cst_57 = arith.constant 5.000000e-01 : f32
    %154 = vector.broadcast %cst_57 : f32 to vector<16x16xf32>
    %155 = arith.mulf %154, %153 : vector<16x16xf32>
    %cst_58 = arith.constant 1.41421354 : f32
    %156 = vector.broadcast %cst_58 : f32 to vector<16x16xf32>
    %157 = arith.divf %153, %156 : vector<16x16xf32>
    %158 = math.erf %157 : vector<16x16xf32>
    %cst_59 = arith.constant 1.000000e+00 : f32
    %159 = vector.broadcast %cst_59 : f32 to vector<16x16xf32>
    %160 = arith.addf %159, %158 : vector<16x16xf32>
    %161 = arith.mulf %155, %160 : vector<16x16xf32>
    %c0_60 = arith.constant 0 : index
    %c0_61 = arith.constant 0 : index
    %162 = vector.load %arg10[%c0_60, %c0_61] : memref<16x32xf32, #tpu.memory_space<vmem>>, vector<16x32xf32>
    %cst_62 = arith.constant dense<0.000000e+00> : vector<16x32xf32>
    %163 = tpu.matmul %161, %162, %cst_62 {dimension_numbers = #tpu.dot_dimension_numbers<[1], [0], [0], [1], [0, 0, 1, 1], [], []>} : vector<16x16xf32>, vector<16x32xf32>, vector<16x32xf32> -> vector<16x32xf32>
    %c0_63 = arith.constant 0 : index
    %c0_64 = arith.constant 0 : index
    %164 = vector.load %arg11[%c0_63, %c0_64] : memref<1x32xf32, #tpu.memory_space<vmem>>, vector<1x32xf32>
    %165 = vector.shape_cast %164 : vector<1x32xf32> to vector<32xf32>
    %166 = vector.shape_cast %165 : vector<32xf32> to vector<1x32xf32>
    %167 = vector.broadcast %166 : vector<1x32xf32> to vector<16x32xf32>
    %168 = arith.addf %163, %167 : vector<16x32xf32>
    %169 = arith.addf %118, %168 : vector<16x32xf32>
    %170 = vector.shape_cast %169 : vector<16x32xf32> to vector<2x8x32xf32>
    %c0_65 = arith.constant 0 : index
    %c0_66 = arith.constant 0 : index
    %c0_67 = arith.constant 0 : index
    %171 = vector.load %arg12[%c0_65, %c0_66, %c0_67] : memref<2x8x32xf32, #tpu.memory_space<vmem>>, vector<2x8x32xf32>
    tpu.vector_store %arg12[%c0_65, %c0_66, %c0_67], %170 {strides = array<i32>} : memref<2x8x32xf32, #tpu.memory_space<vmem>>, vector<2x8x32xf32>,
    return
  }
  func.func @transform_0(%arg0: i32) -> (i32, i32, i32) {
    %c0_i32 = arith.constant 0 : i32
    %c0_i32_0 = arith.constant 0 : i32
    %c0_i32_1 = arith.constant 0 : i32
    return %arg0, %c0_i32, %c0_i32_0 : i32, i32, i32
  }
  func.func @transform_1(%arg0: i32) -> (i32, i32) {
    %c0_i32 = arith.constant 0 : i32
    %c0_i32_0 = arith.constant 0 : i32
    %c0_i32_1 = arith.constant 0 : i32
    return %c0_i32, %c0_i32_0 : i32, i32
  }
  func.func @transform_2(%arg0: i32) -> (i32, i32) {
    %c0_i32 = arith.constant 0 : i32
    %c0_i32_0 = arith.constant 0 : i32
    %c0_i32_1 = arith.constant 0 : i32
    return %c0_i32, %c0_i32_0 : i32, i32
  }
  func.func @transform_3(%arg0: i32) -> (i32, i32) {
    %c0_i32 = arith.constant 0 : i32
    %c0_i32_0 = arith.constant 0 : i32
    %c0_i32_1 = arith.constant 0 : i32
    return %c0_i32, %c0_i32_0 : i32, i32
  }
  func.func @transform_4(%arg0: i32) -> (i32, i32) {
    %c0_i32 = arith.constant 0 : i32
    %c0_i32_0 = arith.constant 0 : i32
    %c0_i32_1 = arith.constant 0 : i32
    return %c0_i32, %c0_i32_0 : i32, i32
  }
  func.func @transform_5(%arg0: i32) -> (i32, i32) {
    %c0_i32 = arith.constant 0 : i32
    %c0_i32_0 = arith.constant 0 : i32
    %c0_i32_1 = arith.constant 0 : i32
    return %c0_i32, %c0_i32_0 : i32, i32
  }
  func.func @transform_6(%arg0: i32) -> (i32, i32) {
    %c0_i32 = arith.constant 0 : i32
    %c0_i32_0 = arith.constant 0 : i32
    %c0_i32_1 = arith.constant 0 : i32
    return %c0_i32, %c0_i32_0 : i32, i32
  }
  func.func @transform_7(%arg0: i32) -> (i32, i32) {
    %c0_i32 = arith.constant 0 : i32
    %c0_i32_0 = arith.constant 0 : i32
    %c0_i32_1 = arith.constant 0 : i32
    return %c0_i32, %c0_i32_0 : i32, i32
  }
  func.func @transform_8(%arg0: i32) -> (i32, i32) {
    %c0_i32 = arith.constant 0 : i32
    %c0_i32_0 = arith.constant 0 : i32
    %c0_i32_1 = arith.constant 0 : i32
    return %c0_i32, %c0_i32_0 : i32, i32
  }
  func.func @transform_9(%arg0: i32) -> (i32, i32) {
    %c0_i32 = arith.constant 0 : i32
    %c0_i32_0 = arith.constant 0 : i32
    %c0_i32_1 = arith.constant 0 : i32
    return %c0_i32, %c0_i32_0 : i32, i32
  }
  func.func @transform_10(%arg0: i32) -> (i32, i32) {
    %c0_i32 = arith.constant 0 : i32
    %c0_i32_0 = arith.constant 0 : i32
    %c0_i32_1 = arith.constant 0 : i32
    return %c0_i32, %c0_i32_0 : i32, i32
  }
  func.func @transform_11(%arg0: i32) -> (i32, i32, i32) {
    %c0_i32 = arith.constant 0 : i32
    %c0_i32_0 = arith.constant 0 : i32
    %c0_i32_1 = arith.constant 0 : i32
    return %arg0, %c0_i32, %c0_i32_0 : i32, i32, i32
  }
}

</mosaic_0001>

<llo_original>
// kernel: tpu_custom_call.1
$region0: #{tpu_custom_call.1}
  #allocation0 [shape = 'u32[]', space=smem, size = 0x4, offset = 0x4, fixed_abs, tag = 'smem constant byte address 0x4 - core index']
  #allocation1 [shape = 'u32[144,128]{1,0:T(1,128)}', space=vmem, size = 0x12000, scoped, tag = 'internal scratch']
  %s0 = inlined_call_operand.vmem [shape: f32[4,8,32], index: 0, kind: input, shape index: {}]
  %s1 = inlined_call_operand.vmem [shape: f32[1,32], index: 1, kind: input, shape index: {}]
  %s2 = inlined_call_operand.vmem [shape: f32[1,32], index: 2, kind: input, shape index: {}]
  %s3 = inlined_call_operand.hbm [shape: f32[32,96], index: 3, kind: input, shape index: {}]
  %s4 = inlined_call_operand.hbm [shape: f32[32,32], index: 4, kind: input, shape index: {}]
  %s5 = inlined_call_operand.vmem [shape: f32[1,32], index: 5, kind: input, shape index: {}]
  %s6 = inlined_call_operand.vmem [shape: f32[1,32], index: 6, kind: input, shape index: {}]
  %s7 = inlined_call_operand.vmem [shape: f32[32,16], index: 7, kind: input, shape index: {}]
  %s8 = inlined_call_operand.vmem [shape: f32[1,16], index: 8, kind: input, shape index: {}]
  %s9 = inlined_call_operand.vmem [shape: f32[16,32], index: 9, kind: input, shape index: {}]
  %s10 = inlined_call_operand.vmem [shape: f32[1,32], index: 10, kind: input, shape index: {}]
  %s11 = inlined_call_operand.hbm [shape: f32[4,8,32], index: 11, kind: output, shape index: {}]
  %s12 = sld [smem:[#allocation0]]
  $region85: #{tpu_custom_call.1} parent=0
    _
  %s14 = ssub.s32 1, %s12
  %s15 = scalar_select 0, %s14, %s12
  $region1: #{tpu_custom_call.1} parent=0
    #allocation2 [shape = 'u8[16384]{0}', space=vmem, size = 0x4000, scoped, tag = 'input window, operand 3, single buffered']
    #allocation3 [shape = 's32[2]{0}', space=sflag, size = 0x8, scoped, tag = 'scoped memory for tpu_custom_call.1']
    #allocation4 [shape = 's32[2]{0}', space=sflag, size = 0x8, scoped, tag = 'scoped memory for tpu_custom_call.1']
    #allocation5 [shape = 'u8[16384]{0}', space=vmem, size = 0x4000, scoped, tag = 'input window, operand 4, single buffered']
    #allocation6 [shape = 's32[1]{0}', space=sflag, size = 0x4, scoped, tag = 'scoped memory for tpu_custom_call.1']
    #allocation7 [shape = 'u8[16384]{0}', space=vmem, size = 0x4000, scoped, tag = 'output window, operand 0']
    %16 = vsyncpa [#allocation3], 0
    %17 = vsyncpa [#allocation6], 0
    %18 = vsyncpa [#allocation4], 0
    %s19 = scalar_lea.sflag [#allocation4], 1
    %20 = vsyncpa %s19, 0
    loop: start=0, step=1, limit=4
    $region2: #{tpu_custom_call.1} parent=1 // loop_pre_header
      _
    $region3: #{tpu_custom_call.1} parent=1 // loop_header
      %s22 = sphi 0, %s26
      %p23 = scmp.ge.s32.totalorder %s22, 4
      %s32 = sphi 0, %s34
      %s35 = sphi 0, %s32
      %s36 = sphi 0, %s35
      %s52 = sphi 0, %s36
      %s56 = sphi 0, %s56
      %s58 = sphi 0, %s56
      %s59 = sphi 0, %s58
      %s73 = sphi 0, %s59
      %s77 = sphi 0, %s77
      %s79 = sphi 0, %s77
      %s80 = sphi 0, %s79
      %s94 = sphi 0, %s80
      %s98 = sphi 0, %s98
      %s100 = sphi 0, %s98
      %s101 = sphi 0, %s100
      %s115 = sphi 0, %s101
      %s119 = sphi 0, %s119
      %s121 = sphi 0, %s119
      %s122 = sphi 0, %s121
      %s136 = sphi 0, %s122
      %s140 = sphi 0, %s140
      %s142 = sphi 0, %s140
      %s143 = sphi 0, %s142
      %s157 = sphi 0, %s143
      %s161 = sphi 0, %s161
      %s163 = sphi 0, %s161
      %s164 = sphi 0, %s163
      %s178 = sphi 0, %s164
      %s182 = sphi 0, %s182
      %s184 = sphi 0, %s182
      %s185 = sphi 0, %s184
      %s199 = sphi 0, %s185
      %s203 = sphi 0, %s203
      %s205 = sphi 0, %s203
      %s206 = sphi 0, %s205
      %s220 = sphi 0, %s206
      %s224 = sphi 0, %s224
      %s226 = sphi 0, %s224
      %s227 = sphi 0, %s226
      %s241 = sphi 0, %s227
      %s245 = sphi 0, %s245
      %s247 = sphi 0, %s245
      %s248 = sphi 0, %s247
      %s262 = sphi 0, %s248
      %s268 = sphi 0, %s270
      %s271 = sphi 0, %s268
      %s272 = sphi 0, %s271
      %s288 = sphi 0, %s272
    $region4: #{tpu_custom_call.1} parent=1 // loop_header_branch
      %25 = sbr.rel (%p23) target = $region8
    $region5: #{tpu_custom_call.1} parent=1 // loop_body
      %s27 = ssub.s32 %s22, 1
      %s28 = ssub.s32 %s22, 2
      %s29 = sadd.s32 %s22, 1
      %s30 = ssub.s32 %s22, %s29
      %p31 = scmp.eq.s32.totalorder %s30, 0
      %s33 = sadd.s32 %s32, 1
      %s34 = scalar_select %p31, %s32, %s33
      %p37 = pneg %p31
      %p38 = scmp.eq.s32.totalorder %s22, 1
      %p39 = por %p37, %p38
      %p40 = scmp.ne.s32.totalorder %s32, %s35
      %p41 = scmp.eq.s32.totalorder %s22, 0
      %p42 = por %p40, %p41
      %p43 = scmp.ne.s32.totalorder %s32, %s35
      %p44 = scmp.eq.s32.totalorder %s27, 1
      %p45 = por %p43, %p44
      %p46 = scmp.ne.s32.totalorder %s35, %s36
      %p47 = scmp.eq.s32.totalorder %s27, 0
      %p48 = por %p46, %p47
      %p49 = scmp.ne.s32.totalorder %s35, %s36
      %p50 = scmp.eq.s32.totalorder %s28, 1
      %p51 = por %p49, %p50
      %p53 = scmp.ne.s32.totalorder %s36, %s52
      %p54 = scmp.eq.s32.totalorder %s28, 0
      %p55 = por %p53, %p54
      %s57 = sadd.s32 %s56, 1
      %p60 = scmp.eq.s32.totalorder %s22, 1
      %p61 = scmp.ne.s32.totalorder %s56, %s58
      %p62 = scmp.eq.s32.totalorder %s22, 0
      %p63 = por %p61, %p62
      %p64 = scmp.ne.s32.totalorder %s56, %s58
      %p65 = scmp.eq.s32.totalorder %s27, 1
      %p66 = por %p64, %p65
      %p67 = scmp.ne.s32.totalorder %s58, %s59
      %p68 = scmp.eq.s32.totalorder %s27, 0
      %p69 = por %p67, %p68
      %p70 = scmp.ne.s32.totalorder %s58, %s59
      %p71 = scmp.eq.s32.totalorder %s28, 1
      %p72 = por %p70, %p71
      %p74 = scmp.ne.s32.totalorder %s59, %s73
      %p75 = scmp.eq.s32.totalorder %s28, 0
      %p76 = por %p74, %p75
      %s78 = sadd.s32 %s77, 1
      %p81 = scmp.eq.s32.totalorder %s22, 1
      %p82 = scmp.ne.s32.totalorder %s77, %s79
      %p83 = scmp.eq.s32.totalorder %s22, 0
      %p84 = por %p82, %p83
      %p85 = scmp.ne.s32.totalorder %s77, %s79
      %p86 = scmp.eq.s32.totalorder %s27, 1
      %p87 = por %p85, %p86
      %p88 = scmp.ne.s32.totalorder %s79, %s80
      %p89 = scmp.eq.s32.totalorder %s27, 0
      %p90 = por %p88, %p89
      %p91 = scmp.ne.s32.totalorder %s79, %s80
      %p92 = scmp.eq.s32.totalorder %s28, 1
      %p93 = por %p91, %p92
      %p95 = scmp.ne.s32.totalorder %s80, %s94
      %p96 = scmp.eq.s32.totalorder %s28, 0
      %p97 = por %p95, %p96
      %s99 = sadd.s32 %s98, 1
      %p102 = scmp.eq.s32.totalorder %s22, 1
      %p103 = scmp.ne.s32.totalorder %s98, %s100
      %p104 = scmp.eq.s32.totalorder %s22, 0
      %p105 = por %p103, %p104
      %p106 = scmp.ne.s32.totalorder %s98, %s100
      %p107 = scmp.eq.s32.totalorder %s27, 1
      %p108 = por %p106, %p107
      %p109 = scmp.ne.s32.totalorder %s100, %s101
      %p110 = scmp.eq.s32.totalorder %s27, 0
      %p111 = por %p109, %p110
      %p112 = scmp.ne.s32.totalorder %s100, %s101
      %p113 = scmp.eq.s32.totalorder %s28, 1
      %p114 = por %p112, %p113
      %p116 = scmp.ne.s32.totalorder %s101, %s115
      %p117 = scmp.eq.s32.totalorder %s28, 0
      %p118 = por %p116, %p117
      %s120 = sadd.s32 %s119, 1
      %p123 = scmp.eq.s32.totalorder %s22, 1
      %p124 = scmp.ne.s32.totalorder %s119, %s121
      %p125 = scmp.eq.s32.totalorder %s22, 0
      %p126 = por %p124, %p125
      %p127 = scmp.ne.s32.totalorder %s119, %s121
      %p128 = scmp.eq.s32.totalorder %s27, 1
      %p129 = por %p127, %p128
      %p130 = scmp.ne.s32.totalorder %s121, %s122
      %p131 = scmp.eq.s32.totalorder %s27, 0
      %p132 = por %p130, %p131
      %p133 = scmp.ne.s32.totalorder %s121, %s122
      %p134 = scmp.eq.s32.totalorder %s28, 1
      %p135 = por %p133, %p134
      %p137 = scmp.ne.s32.totalorder %s122, %s136
      %p138 = scmp.eq.s32.totalorder %s28, 0
      %p139 = por %p137, %p138
      %s141 = sadd.s32 %s140, 1
      %p144 = scmp.eq.s32.totalorder %s22, 1
      %p145 = scmp.ne.s32.totalorder %s140, %s142
      %p146 = scmp.eq.s32.totalorder %s22, 0
      %p147 = por %p145, %p146
      %p148 = scmp.ne.s32.totalorder %s140, %s142
      %p149 = scmp.eq.s32.totalorder %s27, 1
      %p150 = por %p148, %p149
      %p151 = scmp.ne.s32.totalorder %s142, %s143
      %p152 = scmp.eq.s32.totalorder %s27, 0
      %p153 = por %p151, %p152
      %p154 = scmp.ne.s32.totalorder %s142, %s143
      %p155 = scmp.eq.s32.totalorder %s28, 1
      %p156 = por %p154, %p155
      %p158 = scmp.ne.s32.totalorder %s143, %s157
      %p159 = scmp.eq.s32.totalorder %s28, 0
      %p160 = por %p158, %p159
      %s162 = sadd.s32 %s161, 1
      %p165 = scmp.eq.s32.totalorder %s22, 1
      %p166 = scmp.ne.s32.totalorder %s161, %s163
      %p167 = scmp.eq.s32.totalorder %s22, 0
      %p168 = por %p166, %p167
      %p169 = scmp.ne.s32.totalorder %s161, %s163
      %p170 = scmp.eq.s32.totalorder %s27, 1
      %p171 = por %p169, %p170
      %p172 = scmp.ne.s32.totalorder %s163, %s164
      %p173 = scmp.eq.s32.totalorder %s27, 0
      %p174 = por %p172, %p173
      %p175 = scmp.ne.s32.totalorder %s163, %s164
      %p176 = scmp.eq.s32.totalorder %s28, 1
      %p177 = por %p175, %p176
      %p179 = scmp.ne.s32.totalorder %s164, %s178
      %p180 = scmp.eq.s32.totalorder %s28, 0
      %p181 = por %p179, %p180
      %s183 = sadd.s32 %s182, 1
      %p186 = scmp.eq.s32.totalorder %s22, 1
      %p187 = scmp.ne.s32.totalorder %s182, %s184
      %p188 = scmp.eq.s32.totalorder %s22, 0
      %p189 = por %p187, %p188
      %p190 = scmp.ne.s32.totalorder %s182, %s184
      %p191 = scmp.eq.s32.totalorder %s27, 1
      %p192 = por %p190, %p191
      %p193 = scmp.ne.s32.totalorder %s184, %s185
      %p194 = scmp.eq.s32.totalorder %s27, 0
      %p195 = por %p193, %p194
      %p196 = scmp.ne.s32.totalorder %s184, %s185
      %p197 = scmp.eq.s32.totalorder %s28, 1
      %p198 = por %p196, %p197
      %p200 = scmp.ne.s32.totalorder %s185, %s199
      %p201 = scmp.eq.s32.totalorder %s28, 0
      %p202 = por %p200, %p201
      %s204 = sadd.s32 %s203, 1
      %p207 = scmp.eq.s32.totalorder %s22, 1
      %p208 = scmp.ne.s32.totalorder %s203, %s205
      %p209 = scmp.eq.s32.totalorder %s22, 0
      %p210 = por %p208, %p209
      %p211 = scmp.ne.s32.totalorder %s203, %s205
      %p212 = scmp.eq.s32.totalorder %s27, 1
      %p213 = por %p211, %p212
      %p214 = scmp.ne.s32.totalorder %s205, %s206
      %p215 = scmp.eq.s32.totalorder %s27, 0
      %p216 = por %p214, %p215
      %p217 = scmp.ne.s32.totalorder %s205, %s206
      %p218 = scmp.eq.s32.totalorder %s28, 1
      %p219 = por %p217, %p218
      %p221 = scmp.ne.s32.totalorder %s206, %s220
      %p222 = scmp.eq.s32.totalorder %s28, 0
      %p223 = por %p221, %p222
      %s225 = sadd.s32 %s224, 1
      %p228 = scmp.eq.s32.totalorder %s22, 1
      %p229 = scmp.ne.s32.totalorder %s224, %s226
      %p230 = scmp.eq.s32.totalorder %s22, 0
      %p231 = por %p229, %p230
      %p232 = scmp.ne.s32.totalorder %s224, %s226
      %p233 = scmp.eq.s32.totalorder %s27, 1
      %p234 = por %p232, %p233
      %p235 = scmp.ne.s32.totalorder %s226, %s227
      %p236 = scmp.eq.s32.totalorder %s27, 0
      %p237 = por %p235, %p236
      %p238 = scmp.ne.s32.totalorder %s226, %s227
      %p239 = scmp.eq.s32.totalorder %s28, 1
      %p240 = por %p238, %p239
      %p242 = scmp.ne.s32.totalorder %s227, %s241
      %p243 = scmp.eq.s32.totalorder %s28, 0
      %p244 = por %p242, %p243
      %s246 = sadd.s32 %s245, 1
      %p249 = scmp.eq.s32.totalorder %s22, 1
      %p250 = scmp.ne.s32.totalorder %s245, %s247
      %p251 = scmp.eq.s32.totalorder %s22, 0
      %p252 = por %p250, %p251
      %p253 = scmp.ne.s32.totalorder %s245, %s247
      %p254 = scmp.eq.s32.totalorder %s27, 1
      %p255 = por %p253, %p254
      %p256 = scmp.ne.s32.totalorder %s247, %s248
      %p257 = scmp.eq.s32.totalorder %s27, 0
      %p258 = por %p256, %p257
      %p259 = scmp.ne.s32.totalorder %s247, %s248
      %p260 = scmp.eq.s32.totalorder %s28, 1
      %p261 = por %p259, %p260
      %p263 = scmp.ne.s32.totalorder %s248, %s262
      %p264 = scmp.eq.s32.totalorder %s28, 0
      %p265 = por %p263, %p264
      %s266 = ssub.s32 %s22, %s29
      %p267 = scmp.eq.s32.totalorder %s266, 0
      %s269 = sadd.s32 %s268, 1
      %s270 = scalar_select %p267, %s268, %s269
      %p273 = pneg %p267
      %p274 = scmp.eq.s32.totalorder %s22, 1
      %p275 = por %p273, %p274
      %p276 = scmp.ne.s32.totalorder %s268, %s271
      %p277 = scmp.eq.s32.totalorder %s22, 0
      %p278 = por %p276, %p277
      %p279 = scmp.ne.s32.totalorder %s268, %s271
      %p280 = scmp.eq.s32.totalorder %s27, 1
      %p281 = por %p279, %p280
      %p282 = scmp.ne.s32.totalorder %s271, %s272
      %p283 = scmp.eq.s32.totalorder %s27, 0
      %p284 = por %p282, %p283
      %p285 = scmp.ne.s32.totalorder %s271, %s272
      %p286 = scmp.eq.s32.totalorder %s28, 1
      %p287 = por %p285, %p286
      %p289 = scmp.ne.s32.totalorder %s272, %s288
      %p290 = scmp.eq.s32.totalorder %s28, 0
      %p291 = por %p289, %p290
      %p292 = scmp.le.s32.totalorder 1, %s22
      %p293 = scmp.lt.s32.totalorder %s22, 3
      %p294 = pnand %p292, %p293
      %p295 = pneg %p294
      // Predicated region
      $region9: #{tpu_custom_call.1} parent=5 // pred_check
        _
      $region10: #{tpu_custom_call.1} parent=5 // pred_check_branch
        %297 = sbr.rel (%p294) target = $region12
      $region11: #{tpu_custom_call.1} parent=5 // pred_region
        %s298 = ssub.s32 %s22, 1
        // Predicated region
        $region13: #{tpu_custom_call.1} parent=11 // pred_check
          %p299 = pneg %p69
        $region14: #{tpu_custom_call.1} parent=11 // pred_check_branch
          %301 = sbr.rel (%p299) target = $region16
        $region15: #{tpu_custom_call.1} parent=11 // pred_region
          _
        $region16: #{tpu_custom_call.1} parent=11 // pred_fallthru
          _
        // Predicated region
        $region17: #{tpu_custom_call.1} parent=11 // pred_check
          %p302 = pneg %p90
        $region18: #{tpu_custom_call.1} parent=11 // pred_check_branch
          %304 = sbr.rel (%p302) target = $region20
        $region19: #{tpu_custom_call.1} parent=11 // pred_region
          _
        $region20: #{tpu_custom_call.1} parent=11 // pred_fallthru
          _
        // Predicated region
        $region21: #{tpu_custom_call.1} parent=11 // pred_check
          %p305 = pneg %p111
        $region22: #{tpu_custom_call.1} parent=11 // pred_check_branch
          %307 = sbr.rel (%p305) target = $region24
        $region23: #{tpu_custom_call.1} parent=11 // pred_region
          %s309 = ssub.s32 512, 512
          %310 = vsyncadd [#allocation3], %s309
          %s311 = sshll.u32 [#allocation2], 4
          %s312 = int_to_ptr.vmem [resolvable:$true] %s311
          %317 = dma.hbm_to_vmem [thread:$0]  %s3, 512, %s312, [#allocation3], 128, 128, 8
        $region24: #{tpu_custom_call.1} parent=11 // pred_fallthru
          _
        // Predicated region
        $region25: #{tpu_custom_call.1} parent=11 // pred_check
          %p318 = pneg %p132
        $region26: #{tpu_custom_call.1} parent=11 // pred_check_branch
          %320 = sbr.rel (%p318) target = $region28
        $region27: #{tpu_custom_call.1} parent=11 // pred_region
          %s322 = ssub.s32 512, 512
          %323 = vsyncadd [#allocation6], %s322
          %s324 = sshll.u32 [#allocation5], 4
          %s325 = int_to_ptr.vmem [resolvable:$true] %s324
          %330 = dma.hbm_to_vmem [thread:$0]  %s4, 512, %s325, [#allocation6], 128, 128, 8
        $region28: #{tpu_custom_call.1} parent=11 // pred_fallthru
          _
        // Predicated region
        $region29: #{tpu_custom_call.1} parent=11 // pred_check
          %p331 = pneg %p153
        $region30: #{tpu_custom_call.1} parent=11 // pred_check_branch
          %333 = sbr.rel (%p331) target = $region32
        $region31: #{tpu_custom_call.1} parent=11 // pred_region
          _
        $region32: #{tpu_custom_call.1} parent=11 // pred_fallthru
          _
        // Predicated region
        $region33: #{tpu_custom_call.1} parent=11 // pred_check
          %p334 = pneg %p174
        $region34: #{tpu_custom_call.1} parent=11 // pred_check_branch
          %336 = sbr.rel (%p334) target = $region36
        $region35: #{tpu_custom_call.1} parent=11 // pred_region
          _
        $region36: #{tpu_custom_call.1} parent=11 // pred_fallthru
          _
        // Predicated region
        $region37: #{tpu_custom_call.1} parent=11 // pred_check
          %p337 = pneg %p195
        $region38: #{tpu_custom_call.1} parent=11 // pred_check_branch
          %339 = sbr.rel (%p337) target = $region40
        $region39: #{tpu_custom_call.1} parent=11 // pred_region
          _
        $region40: #{tpu_custom_call.1} parent=11 // pred_fallthru
          _
        // Predicated region
        $region41: #{tpu_custom_call.1} parent=11 // pred_check
          %p340 = pneg %p216
        $region42: #{tpu_custom_call.1} parent=11 // pred_check_branch
          %342 = sbr.rel (%p340) target = $region44
        $region43: #{tpu_custom_call.1} parent=11 // pred_region
          _
        $region44: #{tpu_custom_call.1} parent=11 // pred_fallthru
          _
        // Predicated region
        $region45: #{tpu_custom_call.1} parent=11 // pred_check
          %p343 = pneg %p237
        $region46: #{tpu_custom_call.1} parent=11 // pred_check_branch
          %345 = sbr.rel (%p343) target = $region48
        $region47: #{tpu_custom_call.1} parent=11 // pred_region
          _
        $region48: #{tpu_custom_call.1} parent=11 // pred_fallthru
          _
        // Predicated region
        $region49: #{tpu_custom_call.1} parent=11 // pred_check
          %p346 = pneg %p258
        $region50: #{tpu_custom_call.1} parent=11 // pred_check_branch
          %348 = sbr.rel (%p346) target = $region52
        $region51: #{tpu_custom_call.1} parent=11 // pred_region
          _
        $region52: #{tpu_custom_call.1} parent=11 // pred_fallthru
          _
      $region12: #{tpu_custom_call.1} parent=5 // pred_fallthru
        _
      %p349 = scmp.lt.s32.totalorder %s22, 2
      // Predicated region
      $region53: #{tpu_custom_call.1} parent=5 // pred_check
        %p350 = pneg %p349
      $region54: #{tpu_custom_call.1} parent=5 // pred_check_branch
        %352 = sbr.rel (%p350) target = $region56
      $region55: #{tpu_custom_call.1} parent=5 // pred_region
        // Predicated region
        $region57: #{tpu_custom_call.1} parent=55 // pred_check
          %p353 = pneg %p42
        $region58: #{tpu_custom_call.1} parent=55 // pred_check_branch
          %355 = sbr.rel (%p353) target = $region60
        $region59: #{tpu_custom_call.1} parent=55 // pred_region
          %s356 = smul.u32 2, %s22
          %p357 = scmp.lt.s32.totalorder %s356, 3
          %s358 = scalar_select %p357, %s356, 3
          %s359 = smul.addr %s358, 8
          %s360 = scalar_lea.vmem %s0, %s359
          %s361 = smul.u32 2, %s22
        $region60: #{tpu_custom_call.1} parent=55 // pred_fallthru
          _
      $region56: #{tpu_custom_call.1} parent=5 // pred_fallthru
        _
      %p362 = scmp.le.s32.totalorder 1, %s22
      %p363 = scmp.lt.s32.totalorder %s22, 3
      %p364 = pnand %p362, %p363
      %p365 = pneg %p364
      // Predicated region
      $region61: #{tpu_custom_call.1} parent=5 // pred_check
        _
      $region62: #{tpu_custom_call.1} parent=5 // pred_check_branch
        %367 = sbr.rel (%p364) target = $region64
      $region63: #{tpu_custom_call.1} parent=5 // pred_region
        %s368 = ssub.s32 %s22, 1
        // Predicated region
        $region65: #{tpu_custom_call.1} parent=63 // pred_check
          %p369 = pneg %p111
        $region66: #{tpu_custom_call.1} parent=63 // pred_check_branch
          %371 = sbr.rel (%p369) target = $region68
        $region67: #{tpu_custom_call.1} parent=63 // pred_region
          %372 = dma.done [#allocation3], 512
        $region68: #{tpu_custom_call.1} parent=63 // pred_fallthru
          _
        // Predicated region
        $region69: #{tpu_custom_call.1} parent=63 // pred_check
          %p373 = pneg %p132
        $region70: #{tpu_custom_call.1} parent=63 // pred_check_branch
          %375 = sbr.rel (%p373) target = $region72
        $region71: #{tpu_custom_call.1} parent=63 // pred_region
          %376 = dma.done [#allocation6], 512
        $region72: #{tpu_custom_call.1} parent=63 // pred_fallthru
          _
        %s377 = smul.u32 2, %s27
        %p378 = scmp.lt.s32.totalorder %s377, 3
        %s379 = scalar_select %p378, %s377, 3
        %s380 = smul.addr %s379, 8
        %s381 = scalar_lea.vmem %s0, %s380
        %p382 = pneg %p48
        %p383 = pneg %p45
        %p384 = pneg %p69
        %p385 = pneg %p66
        %p386 = pneg %p90
        %p387 = pneg %p87
        %p388 = pneg %p111
        %p389 = pneg %p108
        %p390 = pneg %p132
        %p391 = pneg %p129
        %p392 = pneg %p153
        %p393 = pneg %p150
        %p394 = pneg %p174
        %p395 = pneg %p171
        %p396 = pneg %p195
        %p397 = pneg %p192
        %p398 = pneg %p216
        %p399 = pneg %p213
        %p400 = pneg %p237
        %p401 = pneg %p234
        %p402 = pneg %p258
        %p403 = pneg %p255
        %p404 = pneg %p284
        %p405 = pneg %p281
        %s406 = sand.u32 %s271, 1
        %s407 = scalar_lea.sflag [#allocation4], %s406
        %s408 = sand.u32 %s271, 1
        %s409 = smul.addr %s408, 16
        %s410 = scalar_lea.vmem [#allocation7], %s409
        %s411 = smul.u32 2, %s27
        %p412 = scmp.lt.s32.totalorder %s411, 3
        %s413 = scalar_select %p412, %s411, 3
        %s414 = smul.addr %s413, 8
        %s415 = scalar_lea.vmem %s0, %s414
        %s416 = smul.u32 2, %s27
        %s417 = smul.u32 2, %s27
        %v418 = vld [vmem:[%s415] sm:$0xff]
        %v419 = vld [vmem:[%s415 + $0x8] sm:$0xff]
        %vm420 = vcmask 261120
        %v421 = vsel %vm420, %v418, 0.0
        %422 = vadd.xlane.f32.xlu0 %v421
        %v423 = vpop.xlane.xlu0 %422
        %v424 = vsel %vm420, %v419, 0.0
        %425 = vadd.xlane.f32.xlu0 %v424
        %v426 = vpop.xlane.xlu0 %425
        %v427 = vrcp.pop 32.0
        %v428 = vmul.f32 %v423, %v427
        %v429 = vmul.f32 %v426, %v427
        %v430 = vsub.f32 %v418, %v428
        %v431 = vsub.f32 %v419, %v429
        %v432 = vmul.f32 %v430, %v430
        %v433 = vmul.f32 %v431, %v431
        %v434 = vsel %vm420, %v432, 0.0
        %435 = vadd.xlane.f32.xlu0 %v434
        %v436 = vpop.xlane.xlu0 %435
        %v437 = vsel %vm420, %v433, 0.0
        %438 = vadd.xlane.f32.xlu0 %v437
        %v439 = vpop.xlane.xlu0 %438
        %v440 = vmul.f32 %v436, %v427
        %v441 = vmul.f32 %v439, %v427
        %v442 = vadd.f32 %v440, 1e-05
        %v443 = vadd.f32 %v441, 1e-05
        %v444 = vrsqrt.pop %v442
        %v445 = vrsqrt.pop %v443
        %v446 = vmul.f32 %v430, %v444
        %v447 = vmul.f32 %v431, %v445
        %v448 = vld [vmem:[%s1] sm:$0x1]
        %v450 = vlaneseq
        %v451 = vshrl.u32 %v450, 7
        %v452 = vsub.s32 0, %v451
        %v453 = vrot.slane %v448, %v452
        %v455 = vmul.f32 %v446, %v453
        %v456 = vmul.f32 %v447, %v453
        %v457 = vld [vmem:[%s2] sm:$0x1]
        %v459 = vlaneseq
        %v460 = vshrl.u32 %v459, 7
        %v461 = vsub.s32 0, %v460
        %v462 = vrot.slane %v457, %v461
        %v464 = vadd.f32 %v455, %v462
        %v465 = vadd.f32 %v456, %v462
        %v466 = vld [vmem:[#allocation2] sm:$0xff]
        %v467 = vld [vmem:[#allocation2 + $0x8] sm:$0xff]
        %v468 = vld [vmem:[#allocation2 + $0x10] sm:$0xff]
        %v469 = vld [vmem:[#allocation2 + $0x18] sm:$0xff]
        %v471 = vsel %vm420, %v464, 0
        %v474 = vsel %vm420, %v465, 0
        %476 = vmatprep.subr.mxu0 0.0
        %477 = vmatpush1.msra.mxu0 %v466
        %478 = vmatprep.subr.mxu0 0.0
        %479 = vmatpush1.msra.mxu0 %v467
        %480 = vmatprep.subr.mxu0 0.0
        %481 = vmatpush1.msra.mxu0 %v468
        %482 = vmatprep.subr.mxu0 0.0
        %483 = vmatpush1.msra.mxu0 %v469
        %484 = vmatprep.subr.mxu0 0.0
        %485 = vmatpush1.msra.mxu0 0.0
        %486 = vmatprep.subr.mxu0 0.0
        %487 = vmatpush1.msra.mxu0 0.0
        %488 = vmatprep.subr.mxu0 0.0
        %489 = vmatpush1.msra.mxu0 0.0
        %490 = vmatprep.subr.mxu0 0.0
        %491 = vmatpush1.msra.mxu0 0.0
        %492 = vmatprep.subr.mxu0 0.0
        %493 = vmatpush1.msra.mxu0 0.0
        %494 = vmatprep.subr.mxu0 0.0
        %495 = vmatpush1.msra.mxu0 0.0
        %496 = vmatprep.subr.mxu0 0.0
        %497 = vmatpush1.msra.mxu0 0.0
        %498 = vmatprep.subr.mxu0 0.0
        %499 = vmatpush1.msra.mxu0 0.0
        %500 = vmatprep.subr.mxu0 0.0
        %501 = vmatpush1.msra.mxu0 0.0
        %502 = vmatprep.subr.mxu0 0.0
        %503 = vmatpush1.msra.mxu0 0.0
        %504 = vmatprep.subr.mxu0 0.0
        %505 = vmatpush1.msra.mxu0 0.0
        %506 = vmatprep.subr.mxu0 0.0
        %507 = vmatpush1.msra.mxu0 0.0
        %508 = vmatprep.subr.mxu0 0.0
        %509 = vmatpush1.msra.mxu0 0.0
        %510 = vmatprep.subr.mxu0 0.0
        %511 = vmatpush1.msra.mxu0 0.0
        %512 = vmatprep.subr.mxu0 0.0
        %513 = vmatpush1.msra.mxu0 0.0
        %514 = vmatprep.subr.mxu0 0.0
        %515 = vmatpush1.msra.mxu0 0.0
        %516 = vmatprep.subr.mxu0 0.0
        %517 = vmatpush1.msra.mxu0 0.0
        %518 = vmatprep.subr.mxu0 0.0
        %519 = vmatpush1.msra.mxu0 0.0
        %520 = vmatprep.subr.mxu0 0.0
        %521 = vmatpush1.msra.mxu0 0.0
        %522 = vmatprep.subr.mxu0 0.0
        %523 = vmatpush1.msra.mxu0 0.0
        %524 = vmatprep.subr.mxu0 0.0
        %525 = vmatpush1.msra.mxu0 0.0
        %526 = vmatprep.subr.mxu0 0.0
        %527 = vmatpush1.msra.mxu0 0.0
        %528 = vmatprep.subr.mxu0 0.0
        %529 = vmatpush1.msra.mxu0 0.0
        %530 = vmatprep.subr.mxu0 0.0
        %531 = vmatpush1.msra.mxu0 0.0
        %532 = vmatprep.subr.mxu0 0.0
        %533 = vmatpush1.msra.mxu0 0.0
        %534 = vmatprep.subr.mxu0 0.0
        %535 = vmatpush1.msra.mxu0 0.0
        %536 = vmatprep.subr.mxu0 0.0
        %537 = vmatpush1.msra.mxu0 0.0
        %538 = vmatprep.subr.mxu0 0.0
        %539 = vmatpush1.msra.mxu0 0.0
        %540 = vmatprep.mubr.f32.mxu0 0.0
        %541 = vmatmul.mubr.f32.gmra.mrb[0].mxu0 %v471
        %v542 = vpop.f32.mrb[0].mxu0
        %v543 = vadd.f32 0.0, %v542
        %v544 = vpop.f32.mrb[0].mxu0
        %545 = vmatprep.mubr.f32.mxu0 0.0
        %546 = vmatmul.mubr.f32.gmra.mrb[0].mxu0 %v474
        %v547 = vpop.f32.mrb[0].mxu0
        %v548 = vadd.f32 0.0, %v547
        %v549 = vpop.f32.mrb[0].mxu0
        %550 = vdwg.mxu0
        %v551 = vmul.f32 %v543, 2.828427
        %v552 = vmul.f32 %v548, 2.828427
        %554 = vrot.lane.b32.xlu0 %v543, 96
        %v555 = vpop.permute.xlu0 %554
        %vm556 = vcmask 64512
        %v558 = vsel %vm556, %v551, 0
        %v560 = vsel %vm556, %v555, 0
        %562 = vmatprep.subr.mxu0 0.0
        %563 = vmatpush1.xpose.msra.mxu0 %v560
        %564 = vmatprep.subr.mxu0 0.0
        %565 = vmatpush1.xpose.msra.mxu0 0.0
        %566 = vmatprep.subr.mxu0 0.0
        %567 = vmatpush1.xpose.msra.mxu0 0.0
        %568 = vmatprep.subr.mxu0 0.0
        %569 = vmatpush1.xpose.msra.mxu0 0.0
        %570 = vmatprep.subr.mxu0 0.0
        %571 = vmatpush1.xpose.msra.mxu0 0.0
        %572 = vmatprep.subr.mxu0 0.0
        %573 = vmatpush1.xpose.msra.mxu0 0.0
        %574 = vmatprep.subr.mxu0 0.0
        %575 = vmatpush1.xpose.msra.mxu0 0.0
        %576 = vmatprep.subr.mxu0 0.0
        %577 = vmatpush1.xpose.msra.mxu0 0.0
        %578 = vmatprep.subr.mxu0 0.0
        %579 = vmatpush1.xpose.msra.mxu0 0.0
        %580 = vmatprep.subr.mxu0 0.0
        %581 = vmatpush1.xpose.msra.mxu0 0.0
        %582 = vmatprep.subr.mxu0 0.0
        %583 = vmatpush1.xpose.msra.mxu0 0.0
        %584 = vmatprep.subr.mxu0 0.0
        %585 = vmatpush1.xpose.msra.mxu0 0.0
        %586 = vmatprep.subr.mxu0 0.0
        %587 = vmatpush1.xpose.msra.mxu0 0.0
        %588 = vmatprep.subr.mxu0 0.0
        %589 = vmatpush1.xpose.msra.mxu0 0.0
        %590 = vmatprep.subr.mxu0 0.0
        %591 = vmatpush1.xpose.msra.mxu0 0.0
        %592 = vmatprep.subr.mxu0 0.0
        %593 = vmatpush1.xpose.msra.mxu0 0.0
        %594 = vmatprep.subr.mxu0 0.0
        %595 = vmatpush1.xpose.msra.mxu0 0.0
        %596 = vmatprep.subr.mxu0 0.0
        %597 = vmatpush1.xpose.msra.mxu0 0.0
        %598 = vmatprep.subr.mxu0 0.0
        %599 = vmatpush1.xpose.msra.mxu0 0.0
        %600 = vmatprep.subr.mxu0 0.0
        %601 = vmatpush1.xpose.msra.mxu0 0.0
        %602 = vmatprep.subr.mxu0 0.0
        %603 = vmatpush1.xpose.msra.mxu0 0.0
        %604 = vmatprep.subr.mxu0 0.0
        %605 = vmatpush1.xpose.msra.mxu0 0.0
        %606 = vmatprep.subr.mxu0 0.0
        %607 = vmatpush1.xpose.msra.mxu0 0.0
        %608 = vmatprep.subr.mxu0 0.0
        %609 = vmatpush1.xpose.msra.mxu0 0.0
        %610 = vmatprep.subr.mxu0 0.0
        %611 = vmatpush1.xpose.msra.mxu0 0.0
        %612 = vmatprep.subr.mxu0 0.0
        %613 = vmatpush1.xpose.msra.mxu0 0.0
        %614 = vmatprep.subr.mxu0 0.0
        %615 = vmatpush1.xpose.msra.mxu0 0.0
        %616 = vmatprep.subr.mxu0 0.0
        %617 = vmatpush1.xpose.msra.mxu0 0.0
        %618 = vmatprep.subr.mxu0 0.0
        %619 = vmatpush1.xpose.msra.mxu0 0.0
        %620 = vmatprep.subr.mxu0 0.0
        %621 = vmatpush1.xpose.msra.mxu0 0.0
        %622 = vmatprep.subr.mxu0 0.0
        %623 = vmatpush1.xpose.msra.mxu0 0.0
        %624 = vmatprep.subr.mxu0 0.0
        %625 = vmatpush1.xpose.msra.mxu0 0.0
        %626 = vmatprep.mubr.f32.mxu0 0.0
        %627 = vmatmul.mubr.f32.gmra.mrb[0].mxu0 %v558
        %v628 = vpop.f32.mrb[0].mxu0
        %v629 = vadd.f32 0.0, %v628
        %v630 = vpop.f32.mrb[0].mxu0
        %631 = vdwg.mxu0
        %633 = vrot.lane.b32.xlu0 %v548, 96
        %v634 = vpop.permute.xlu0 %633
        %v636 = vsel %vm556, %v552, 0
        %v638 = vsel %vm556, %v634, 0
        %640 = vmatprep.subr.mxu0 0.0
        %641 = vmatpush1.xpose.msra.mxu0 %v638
        %642 = vmatprep.subr.mxu0 0.0
        %643 = vmatpush1.xpose.msra.mxu0 0.0
        %644 = vmatprep.subr.mxu0 0.0
        %645 = vmatpush1.xpose.msra.mxu0 0.0
        %646 = vmatprep.subr.mxu0 0.0
        %647 = vmatpush1.xpose.msra.mxu0 0.0
        %648 = vmatprep.subr.mxu0 0.0
        %649 = vmatpush1.xpose.msra.mxu0 0.0
        %650 = vmatprep.subr.mxu0 0.0
        %651 = vmatpush1.xpose.msra.mxu0 0.0
        %652 = vmatprep.subr.mxu0 0.0
        %653 = vmatpush1.xpose.msra.mxu0 0.0
        %654 = vmatprep.subr.mxu0 0.0
        %655 = vmatpush1.xpose.msra.mxu0 0.0
        %656 = vmatprep.subr.mxu0 0.0
        %657 = vmatpush1.xpose.msra.mxu0 0.0
        %658 = vmatprep.subr.mxu0 0.0
        %659 = vmatpush1.xpose.msra.mxu0 0.0
        %660 = vmatprep.subr.mxu0 0.0
        %661 = vmatpush1.xpose.msra.mxu0 0.0
        %662 = vmatprep.subr.mxu0 0.0
        %663 = vmatpush1.xpose.msra.mxu0 0.0
        %664 = vmatprep.subr.mxu0 0.0
        %665 = vmatpush1.xpose.msra.mxu0 0.0
        %666 = vmatprep.subr.mxu0 0.0
        %667 = vmatpush1.xpose.msra.mxu0 0.0
        %668 = vmatprep.subr.mxu0 0.0
        %669 = vmatpush1.xpose.msra.mxu0 0.0
        %670 = vmatprep.subr.mxu0 0.0
        %671 = vmatpush1.xpose.msra.mxu0 0.0
        %672 = vmatprep.subr.mxu0 0.0
        %673 = vmatpush1.xpose.msra.mxu0 0.0
        %674 = vmatprep.subr.mxu0 0.0
        %675 = vmatpush1.xpose.msra.mxu0 0.0
        %676 = vmatprep.subr.mxu0 0.0
        %677 = vmatpush1.xpose.msra.mxu0 0.0
        %678 = vmatprep.subr.mxu0 0.0
        %679 = vmatpush1.xpose.msra.mxu0 0.0
        %680 = vmatprep.subr.mxu0 0.0
        %681 = vmatpush1.xpose.msra.mxu0 0.0
        %682 = vmatprep.subr.mxu0 0.0
        %683 = vmatpush1.xpose.msra.mxu0 0.0
        %684 = vmatprep.subr.mxu0 0.0
        %685 = vmatpush1.xpose.msra.mxu0 0.0
        %686 = vmatprep.subr.mxu0 0.0
        %687 = vmatpush1.xpose.msra.mxu0 0.0
        %688 = vmatprep.subr.mxu0 0.0
        %689 = vmatpush1.xpose.msra.mxu0 0.0
        %690 = vmatprep.subr.mxu0 0.0
        %691 = vmatpush1.xpose.msra.mxu0 0.0
        %692 = vmatprep.subr.mxu0 0.0
        %693 = vmatpush1.xpose.msra.mxu0 0.0
        %694 = vmatprep.subr.mxu0 0.0
        %695 = vmatpush1.xpose.msra.mxu0 0.0
        %696 = vmatprep.subr.mxu0 0.0
        %697 = vmatpush1.xpose.msra.mxu0 0.0
        %698 = vmatprep.subr.mxu0 0.0
        %699 = vmatpush1.xpose.msra.mxu0 0.0
        %700 = vmatprep.subr.mxu0 0.0
        %701 = vmatpush1.xpose.msra.mxu0 0.0
        %702 = vmatprep.subr.mxu0 0.0
        %703 = vmatpush1.xpose.msra.mxu0 0.0
        %704 = vmatprep.mubr.f32.mxu0 0.0
        %705 = vmatmul.mubr.f32.gmra.mrb[0].mxu0 %v636
        %v706 = vpop.f32.mrb[0].mxu0
        %v707 = vadd.f32 0.0, %v706
        %v708 = vpop.f32.mrb[0].mxu0
        %709 = vdwg.mxu0
        %v710 = vsel %vm556, %v629, -inf
        %711 = vmax.xlane.f32.xlu0 %v710
        %v712 = vpop.xlane.xlu0 %711
        %v713 = vsel %vm556, %v707, -inf
        %714 = vmax.xlane.f32.xlu0 %v713
        %v715 = vpop.xlane.xlu0 %714
        %v716 = vsub.f32 %v629, %v712
        %v717 = vsub.f32 %v707, %v715
        %v718 = vmul.f32 %v716, 1.442695
        %v719 = vpow.pop %v718
        %v720 = vmul.f32 %v717, 1.442695
        %v721 = vpow.pop %v720
        %v722 = vsel %vm556, %v719, 0.0
        %723 = vadd.xlane.f32.xlu0 %v722
        %v724 = vpop.xlane.xlu0 %723
        %v725 = vsel %vm556, %v721, 0.0
        %726 = vadd.xlane.f32.xlu0 %v725
        %v727 = vpop.xlane.xlu0 %726
        %v728 = vrcp.pop %v724
        %v729 = vrcp.pop %v727
        %v730 = vmul.f32 %v719, %v728
        %v731 = vmul.f32 %v721, %v729
        %732 = vrot.lane.b32.xlu0 %v543, 64
        %v733 = vpop.permute.xlu0 %732
        %v736 = vsel %vm556, %v730, 0
        %738 = vmatprep.subr.mxu0 0.0
        %739 = vmatpush1.msra.mxu0 %v733
        %740 = vmatprep.subr.mxu0 0.0
        %741 = vmatpush1.msra.mxu0 0.0
        %742 = vmatprep.subr.mxu0 0.0
        %743 = vmatpush1.msra.mxu0 0.0
        %744 = vmatprep.subr.mxu0 0.0
        %745 = vmatpush1.msra.mxu0 0.0
        %746 = vmatprep.subr.mxu0 0.0
        %747 = vmatpush1.msra.mxu0 0.0
        %748 = vmatprep.subr.mxu0 0.0
        %749 = vmatpush1.msra.mxu0 0.0
        %750 = vmatprep.subr.mxu0 0.0
        %751 = vmatpush1.msra.mxu0 0.0
        %752 = vmatprep.subr.mxu0 0.0
        %753 = vmatpush1.msra.mxu0 0.0
        %754 = vmatprep.subr.mxu0 0.0
        %755 = vmatpush1.msra.mxu0 0.0
        %756 = vmatprep.subr.mxu0 0.0
        %757 = vmatpush1.msra.mxu0 0.0
        %758 = vmatprep.subr.mxu0 0.0
        %759 = vmatpush1.msra.mxu0 0.0
        %760 = vmatprep.subr.mxu0 0.0
        %761 = vmatpush1.msra.mxu0 0.0
        %762 = vmatprep.subr.mxu0 0.0
        %763 = vmatpush1.msra.mxu0 0.0
        %764 = vmatprep.subr.mxu0 0.0
        %765 = vmatpush1.msra.mxu0 0.0
        %766 = vmatprep.subr.mxu0 0.0
        %767 = vmatpush1.msra.mxu0 0.0
        %768 = vmatprep.subr.mxu0 0.0
        %769 = vmatpush1.msra.mxu0 0.0
        %770 = vmatprep.subr.mxu0 0.0
        %771 = vmatpush1.msra.mxu0 0.0
        %772 = vmatprep.subr.mxu0 0.0
        %773 = vmatpush1.msra.mxu0 0.0
        %774 = vmatprep.subr.mxu0 0.0
        %775 = vmatpush1.msra.mxu0 0.0
        %776 = vmatprep.subr.mxu0 0.0
        %777 = vmatpush1.msra.mxu0 0.0
        %778 = vmatprep.subr.mxu0 0.0
        %779 = vmatpush1.msra.mxu0 0.0
        %780 = vmatprep.subr.mxu0 0.0
        %781 = vmatpush1.msra.mxu0 0.0
        %782 = vmatprep.subr.mxu0 0.0
        %783 = vmatpush1.msra.mxu0 0.0
        %784 = vmatprep.subr.mxu0 0.0
        %785 = vmatpush1.msra.mxu0 0.0
        %786 = vmatprep.subr.mxu0 0.0
        %787 = vmatpush1.msra.mxu0 0.0
        %788 = vmatprep.subr.mxu0 0.0
        %789 = vmatpush1.msra.mxu0 0.0
        %790 = vmatprep.subr.mxu0 0.0
        %791 = vmatpush1.msra.mxu0 0.0
        %792 = vmatprep.subr.mxu0 0.0
        %793 = vmatpush1.msra.mxu0 0.0
        %794 = vmatprep.subr.mxu0 0.0
        %795 = vmatpush1.msra.mxu0 0.0
        %796 = vmatprep.subr.mxu0 0.0
        %797 = vmatpush1.msra.mxu0 0.0
        %798 = vmatprep.subr.mxu0 0.0
        %799 = vmatpush1.msra.mxu0 0.0
        %800 = vmatprep.subr.mxu0 0.0
        %801 = vmatpush1.msra.mxu0 0.0
        %802 = vmatprep.mubr.f32.mxu0 0.0
        %803 = vmatmul.mubr.f32.gmra.mrb[0].mxu0 %v736
        %v804 = vpop.f32.mrb[0].mxu0
        %v805 = vadd.f32 0.0, %v804
        %v806 = vpop.f32.mrb[0].mxu0
        %807 = vdwg.mxu0
        %808 = vrot.lane.b32.xlu0 %v548, 64
        %v809 = vpop.permute.xlu0 %808
        %v812 = vsel %vm556, %v731, 0
        %814 = vmatprep.subr.mxu0 0.0
        %815 = vmatpush1.msra.mxu0 %v809
        %816 = vmatprep.subr.mxu0 0.0
        %817 = vmatpush1.msra.mxu0 0.0
        %818 = vmatprep.subr.mxu0 0.0
        %819 = vmatpush1.msra.mxu0 0.0
        %820 = vmatprep.subr.mxu0 0.0
        %821 = vmatpush1.msra.mxu0 0.0
        %822 = vmatprep.subr.mxu0 0.0
        %823 = vmatpush1.msra.mxu0 0.0
        %824 = vmatprep.subr.mxu0 0.0
        %825 = vmatpush1.msra.mxu0 0.0
        %826 = vmatprep.subr.mxu0 0.0
        %827 = vmatpush1.msra.mxu0 0.0
        %828 = vmatprep.subr.mxu0 0.0
        %829 = vmatpush1.msra.mxu0 0.0
        %830 = vmatprep.subr.mxu0 0.0
        %831 = vmatpush1.msra.mxu0 0.0
        %832 = vmatprep.subr.mxu0 0.0
        %833 = vmatpush1.msra.mxu0 0.0
        %834 = vmatprep.subr.mxu0 0.0
        %835 = vmatpush1.msra.mxu0 0.0
        %836 = vmatprep.subr.mxu0 0.0
        %837 = vmatpush1.msra.mxu0 0.0
        %838 = vmatprep.subr.mxu0 0.0
        %839 = vmatpush1.msra.mxu0 0.0
        %840 = vmatprep.subr.mxu0 0.0
        %841 = vmatpush1.msra.mxu0 0.0
        %842 = vmatprep.subr.mxu0 0.0
        %843 = vmatpush1.msra.mxu0 0.0
        %844 = vmatprep.subr.mxu0 0.0
        %845 = vmatpush1.msra.mxu0 0.0
        %846 = vmatprep.subr.mxu0 0.0
        %847 = vmatpush1.msra.mxu0 0.0
        %848 = vmatprep.subr.mxu0 0.0
        %849 = vmatpush1.msra.mxu0 0.0
        %850 = vmatprep.subr.mxu0 0.0
        %851 = vmatpush1.msra.mxu0 0.0
        %852 = vmatprep.subr.mxu0 0.0
        %853 = vmatpush1.msra.mxu0 0.0
        %854 = vmatprep.subr.mxu0 0.0
        %855 = vmatpush1.msra.mxu0 0.0
        %856 = vmatprep.subr.mxu0 0.0
        %857 = vmatpush1.msra.mxu0 0.0
        %858 = vmatprep.subr.mxu0 0.0
        %859 = vmatpush1.msra.mxu0 0.0
        %860 = vmatprep.subr.mxu0 0.0
        %861 = vmatpush1.msra.mxu0 0.0
        %862 = vmatprep.subr.mxu0 0.0
        %863 = vmatpush1.msra.mxu0 0.0
        %864 = vmatprep.subr.mxu0 0.0
        %865 = vmatpush1.msra.mxu0 0.0
        %866 = vmatprep.subr.mxu0 0.0
        %867 = vmatpush1.msra.mxu0 0.0
        %868 = vmatprep.subr.mxu0 0.0
        %869 = vmatpush1.msra.mxu0 0.0
        %870 = vmatprep.subr.mxu0 0.0
        %871 = vmatpush1.msra.mxu0 0.0
        %872 = vmatprep.subr.mxu0 0.0
        %873 = vmatpush1.msra.mxu0 0.0
        %874 = vmatprep.subr.mxu0 0.0
        %875 = vmatpush1.msra.mxu0 0.0
        %876 = vmatprep.subr.mxu0 0.0
        %877 = vmatpush1.msra.mxu0 0.0
        %878 = vmatprep.mubr.f32.mxu0 0.0
        %879 = vmatmul.mubr.f32.gmra.mrb[0].mxu0 %v812
        %v880 = vpop.f32.mrb[0].mxu0
        %v881 = vadd.f32 0.0, %v880
        %v882 = vpop.f32.mrb[0].mxu0
        %883 = vdwg.mxu0
        %v884 = vld [vmem:[#allocation5] sm:$0xff]
        %885 = vrot.lane.b32.xlu0 %v551, 120
        %v886 = vpop.permute.xlu0 %885
        %887 = vrot.lane.b32.xlu0 %v543, 88
        %v888 = vpop.permute.xlu0 %887
        %v889 = vsel %vm556, %v886, 0
        %v891 = vsel %vm556, %v888, 0
        %893 = vmatprep.subr.mxu0 0.0
        %894 = vmatpush1.xpose.msra.mxu0 %v891
        %895 = vmatprep.subr.mxu0 0.0
        %896 = vmatpush1.xpose.msra.mxu0 0.0
        %897 = vmatprep.subr.mxu0 0.0
        %898 = vmatpush1.xpose.msra.mxu0 0.0
        %899 = vmatprep.subr.mxu0 0.0
        %900 = vmatpush1.xpose.msra.mxu0 0.0
        %901 = vmatprep.subr.mxu0 0.0
        %902 = vmatpush1.xpose.msra.mxu0 0.0
        %903 = vmatprep.subr.mxu0 0.0
        %904 = vmatpush1.xpose.msra.mxu0 0.0
        %905 = vmatprep.subr.mxu0 0.0
        %906 = vmatpush1.xpose.msra.mxu0 0.0
        %907 = vmatprep.subr.mxu0 0.0
        %908 = vmatpush1.xpose.msra.mxu0 0.0
        %909 = vmatprep.subr.mxu0 0.0
        %910 = vmatpush1.xpose.msra.mxu0 0.0
        %911 = vmatprep.subr.mxu0 0.0
        %912 = vmatpush1.xpose.msra.mxu0 0.0
        %913 = vmatprep.subr.mxu0 0.0
        %914 = vmatpush1.xpose.msra.mxu0 0.0
        %915 = vmatprep.subr.mxu0 0.0
        %916 = vmatpush1.xpose.msra.mxu0 0.0
        %917 = vmatprep.subr.mxu0 0.0
        %918 = vmatpush1.xpose.msra.mxu0 0.0
        %919 = vmatprep.subr.mxu0 0.0
        %920 = vmatpush1.xpose.msra.mxu0 0.0
        %921 = vmatprep.subr.mxu0 0.0
        %922 = vmatpush1.xpose.msra.mxu0 0.0
        %923 = vmatprep.subr.mxu0 0.0
        %924 = vmatpush1.xpose.msra.mxu0 0.0
        %925 = vmatprep.subr.mxu0 0.0
        %926 = vmatpush1.xpose.msra.mxu0 0.0
        %927 = vmatprep.subr.mxu0 0.0
        %928 = vmatpush1.xpose.msra.mxu0 0.0
        %929 = vmatprep.subr.mxu0 0.0
        %930 = vmatpush1.xpose.msra.mxu0 0.0
        %931 = vmatprep.subr.mxu0 0.0
        %932 = vmatpush1.xpose.msra.mxu0 0.0
        %933 = vmatprep.subr.mxu0 0.0
        %934 = vmatpush1.xpose.msra.mxu0 0.0
        %935 = vmatprep.subr.mxu0 0.0
        %936 = vmatpush1.xpose.msra.mxu0 0.0
        %937 = vmatprep.subr.mxu0 0.0
        %938 = vmatpush1.xpose.msra.mxu0 0.0
        %939 = vmatprep.subr.mxu0 0.0
        %940 = vmatpush1.xpose.msra.mxu0 0.0
        %941 = vmatprep.subr.mxu0 0.0
        %942 = vmatpush1.xpose.msra.mxu0 0.0
        %943 = vmatprep.subr.mxu0 0.0
        %944 = vmatpush1.xpose.msra.mxu0 0.0
        %945 = vmatprep.subr.mxu0 0.0
        %946 = vmatpush1.xpose.msra.mxu0 0.0
        %947 = vmatprep.subr.mxu0 0.0
        %948 = vmatpush1.xpose.msra.mxu0 0.0
        %949 = vmatprep.subr.mxu0 0.0
        %950 = vmatpush1.xpose.msra.mxu0 0.0
        %951 = vmatprep.subr.mxu0 0.0
        %952 = vmatpush1.xpose.msra.mxu0 0.0
        %953 = vmatprep.subr.mxu0 0.0
        %954 = vmatpush1.xpose.msra.mxu0 0.0
        %955 = vmatprep.subr.mxu0 0.0
        %956 = vmatpush1.xpose.msra.mxu0 0.0
        %957 = vmatprep.mubr.f32.mxu0 0.0
        %958 = vmatmul.mubr.f32.gmra.mrb[0].mxu0 %v889
        %v959 = vpop.f32.mrb[0].mxu0
        %v960 = vadd.f32 0.0, %v959
        %v961 = vpop.f32.mrb[0].mxu0
        %962 = vdwg.mxu0
        %963 = vrot.lane.b32.xlu0 %v552, 120
        %v964 = vpop.permute.xlu0 %963
        %965 = vrot.lane.b32.xlu0 %v548, 88
        %v966 = vpop.permute.xlu0 %965
        %v967 = vsel %vm556, %v964, 0
        %v969 = vsel %vm556, %v966, 0
        %971 = vmatprep.subr.mxu0 0.0
        %972 = vmatpush1.xpose.msra.mxu0 %v969
        %973 = vmatprep.subr.mxu0 0.0
        %974 = vmatpush1.xpose.msra.mxu0 0.0
        %975 = vmatprep.subr.mxu0 0.0
        %976 = vmatpush1.xpose.msra.mxu0 0.0
        %977 = vmatprep.subr.mxu0 0.0
        %978 = vmatpush1.xpose.msra.mxu0 0.0
        %979 = vmatprep.subr.mxu0 0.0
        %980 = vmatpush1.xpose.msra.mxu0 0.0
        %981 = vmatprep.subr.mxu0 0.0
        %982 = vmatpush1.xpose.msra.mxu0 0.0
        %983 = vmatprep.subr.mxu0 0.0
        %984 = vmatpush1.xpose.msra.mxu0 0.0
        %985 = vmatprep.subr.mxu0 0.0
        %986 = vmatpush1.xpose.msra.mxu0 0.0
        %987 = vmatprep.subr.mxu0 0.0
        %988 = vmatpush1.xpose.msra.mxu0 0.0
        %989 = vmatprep.subr.mxu0 0.0
        %990 = vmatpush1.xpose.msra.mxu0 0.0
        %991 = vmatprep.subr.mxu0 0.0
        %992 = vmatpush1.xpose.msra.mxu0 0.0
        %993 = vmatprep.subr.mxu0 0.0
        %994 = vmatpush1.xpose.msra.mxu0 0.0
        %995 = vmatprep.subr.mxu0 0.0
        %996 = vmatpush1.xpose.msra.mxu0 0.0
        %997 = vmatprep.subr.mxu0 0.0
        %998 = vmatpush1.xpose.msra.mxu0 0.0
        %999 = vmatprep.subr.mxu0 0.0
        %1000 = vmatpush1.xpose.msra.mxu0 0.0
        %1001 = vmatprep.subr.mxu0 0.0
        %1002 = vmatpush1.xpose.msra.mxu0 0.0
        %1003 = vmatprep.subr.mxu0 0.0
        %1004 = vmatpush1.xpose.msra.mxu0 0.0
        %1005 = vmatprep.subr.mxu0 0.0
        %1006 = vmatpush1.xpose.msra.mxu0 0.0
        %1007 = vmatprep.subr.mxu0 0.0
        %1008 = vmatpush1.xpose.msra.mxu0 0.0
        %1009 = vmatprep.subr.mxu0 0.0
        %1010 = vmatpush1.xpose.msra.mxu0 0.0
        %1011 = vmatprep.subr.mxu0 0.0
        %1012 = vmatpush1.xpose.msra.mxu0 0.0
        %1013 = vmatprep.subr.mxu0 0.0
        %1014 = vmatpush1.xpose.msra.mxu0 0.0
        %1015 = vmatprep.subr.mxu0 0.0
        %1016 = vmatpush1.xpose.msra.mxu0 0.0
        %1017 = vmatprep.subr.mxu0 0.0
        %1018 = vmatpush1.xpose.msra.mxu0 0.0
        %1019 = vmatprep.subr.mxu0 0.0
        %1020 = vmatpush1.xpose.msra.mxu0 0.0
        %1021 = vmatprep.subr.mxu0 0.0
        %1022 = vmatpush1.xpose.msra.mxu0 0.0
        %1023 = vmatprep.subr.mxu0 0.0
        %1024 = vmatpush1.xpose.msra.mxu0 0.0
        %1025 = vmatprep.subr.mxu0 0.0
        %1026 = vmatpush1.xpose.msra.mxu0 0.0
        %1027 = vmatprep.subr.mxu0 0.0
        %1028 = vmatpush1.xpose.msra.mxu0 0.0
        %1029 = vmatprep.subr.mxu0 0.0
        %1030 = vmatpush1.xpose.msra.mxu0 0.0
        %1031 = vmatprep.subr.mxu0 0.0
        %1032 = vmatpush1.xpose.msra.mxu0 0.0
        %1033 = vmatprep.subr.mxu0 0.0
        %1034 = vmatpush1.xpose.msra.mxu0 0.0
        %1035 = vmatprep.mubr.f32.mxu0 0.0
        %1036 = vmatmul.mubr.f32.gmra.mrb[0].mxu0 %v967
        %v1037 = vpop.f32.mrb[0].mxu0
        %v1038 = vadd.f32 0.0, %v1037
        %v1039 = vpop.f32.mrb[0].mxu0
        %1040 = vdwg.mxu0
        %v1041 = vsel %vm556, %v960, -inf
        %1042 = vmax.xlane.f32.xlu0 %v1041
        %v1043 = vpop.xlane.xlu0 %1042
        %v1044 = vsel %vm556, %v1038, -inf
        %1045 = vmax.xlane.f32.xlu0 %v1044
        %v1046 = vpop.xlane.xlu0 %1045
        %v1047 = vsub.f32 %v960, %v1043
        %v1048 = vsub.f32 %v1038, %v1046
        %v1049 = vmul.f32 %v1047, 1.442695
        %v1050 = vpow.pop %v1049
        %v1051 = vmul.f32 %v1048, 1.442695
        %v1052 = vpow.pop %v1051
        %v1053 = vsel %vm556, %v1050, 0.0
        %1054 = vadd.xlane.f32.xlu0 %v1053
        %v1055 = vpop.xlane.xlu0 %1054
        %v1056 = vsel %vm556, %v1052, 0.0
        %1057 = vadd.xlane.f32.xlu0 %v1056
        %v1058 = vpop.xlane.xlu0 %1057
        %v1059 = vrcp.pop %v1055
        %v1060 = vrcp.pop %v1058
        %v1061 = vmul.f32 %v1050, %v1059
        %v1062 = vmul.f32 %v1052, %v1060
        %1063 = vrot.lane.b32.xlu0 %v543, 56
        %v1064 = vpop.permute.xlu0 %1063
        %v1067 = vsel %vm556, %v1061, 0
        %1069 = vmatprep.subr.mxu0 0.0
        %1070 = vmatpush1.msra.mxu0 %v1064
        %1071 = vmatprep.subr.mxu0 0.0
        %1072 = vmatpush1.msra.mxu0 0.0
        %1073 = vmatprep.subr.mxu0 0.0
        %1074 = vmatpush1.msra.mxu0 0.0
        %1075 = vmatprep.subr.mxu0 0.0
        %1076 = vmatpush1.msra.mxu0 0.0
        %1077 = vmatprep.subr.mxu0 0.0
        %1078 = vmatpush1.msra.mxu0 0.0
        %1079 = vmatprep.subr.mxu0 0.0
        %1080 = vmatpush1.msra.mxu0 0.0
        %1081 = vmatprep.subr.mxu0 0.0
        %1082 = vmatpush1.msra.mxu0 0.0
        %1083 = vmatprep.subr.mxu0 0.0
        %1084 = vmatpush1.msra.mxu0 0.0
        %1085 = vmatprep.subr.mxu0 0.0
        %1086 = vmatpush1.msra.mxu0 0.0
        %1087 = vmatprep.subr.mxu0 0.0
        %1088 = vmatpush1.msra.mxu0 0.0
        %1089 = vmatprep.subr.mxu0 0.0
        %1090 = vmatpush1.msra.mxu0 0.0
        %1091 = vmatprep.subr.mxu0 0.0
        %1092 = vmatpush1.msra.mxu0 0.0
        %1093 = vmatprep.subr.mxu0 0.0
        %1094 = vmatpush1.msra.mxu0 0.0
        %1095 = vmatprep.subr.mxu0 0.0
        %1096 = vmatpush1.msra.mxu0 0.0
        %1097 = vmatprep.subr.mxu0 0.0
        %1098 = vmatpush1.msra.mxu0 0.0
        %1099 = vmatprep.subr.mxu0 0.0
        %1100 = vmatpush1.msra.mxu0 0.0
        %1101 = vmatprep.subr.mxu0 0.0
        %1102 = vmatpush1.msra.mxu0 0.0
        %1103 = vmatprep.subr.mxu0 0.0
        %1104 = vmatpush1.msra.mxu0 0.0
        %1105 = vmatprep.subr.mxu0 0.0
        %1106 = vmatpush1.msra.mxu0 0.0
        %1107 = vmatprep.subr.mxu0 0.0
        %1108 = vmatpush1.msra.mxu0 0.0
        %1109 = vmatprep.subr.mxu0 0.0
        %1110 = vmatpush1.msra.mxu0 0.0
        %1111 = vmatprep.subr.mxu0 0.0
        %1112 = vmatpush1.msra.mxu0 0.0
        %1113 = vmatprep.subr.mxu0 0.0
        %1114 = vmatpush1.msra.mxu0 0.0
        %1115 = vmatprep.subr.mxu0 0.0
        %1116 = vmatpush1.msra.mxu0 0.0
        %1117 = vmatprep.subr.mxu0 0.0
        %1118 = vmatpush1.msra.mxu0 0.0
        %1119 = vmatprep.subr.mxu0 0.0
        %1120 = vmatpush1.msra.mxu0 0.0
        %1121 = vmatprep.subr.mxu0 0.0
        %1122 = vmatpush1.msra.mxu0 0.0
        %1123 = vmatprep.subr.mxu0 0.0
        %1124 = vmatpush1.msra.mxu0 0.0
        %1125 = vmatprep.subr.mxu0 0.0
        %1126 = vmatpush1.msra.mxu0 0.0
        %1127 = vmatprep.subr.mxu0 0.0
        %1128 = vmatpush1.msra.mxu0 0.0
        %1129 = vmatprep.subr.mxu0 0.0
        %1130 = vmatpush1.msra.mxu0 0.0
        %1131 = vmatprep.subr.mxu0 0.0
        %1132 = vmatpush1.msra.mxu0 0.0
        %1133 = vmatprep.mubr.f32.mxu0 0.0
        %1134 = vmatmul.mubr.f32.gmra.mrb[0].mxu0 %v1067
        %v1135 = vpop.f32.mrb[0].mxu0
        %v1136 = vadd.f32 0.0, %v1135
        %v1137 = vpop.f32.mrb[0].mxu0
        %1138 = vdwg.mxu0
        %1139 = vrot.lane.b32.xlu0 %v548, 56
        %v1140 = vpop.permute.xlu0 %1139
        %v1143 = vsel %vm556, %v1062, 0
        %1145 = vmatprep.subr.mxu0 0.0
        %1146 = vmatpush1.msra.mxu0 %v1140
        %1147 = vmatprep.subr.mxu0 0.0
        %1148 = vmatpush1.msra.mxu0 0.0
        %1149 = vmatprep.subr.mxu0 0.0
        %1150 = vmatpush1.msra.mxu0 0.0
        %1151 = vmatprep.subr.mxu0 0.0
        %1152 = vmatpush1.msra.mxu0 0.0
        %1153 = vmatprep.subr.mxu0 0.0
        %1154 = vmatpush1.msra.mxu0 0.0
        %1155 = vmatprep.subr.mxu0 0.0
        %1156 = vmatpush1.msra.mxu0 0.0
        %1157 = vmatprep.subr.mxu0 0.0
        %1158 = vmatpush1.msra.mxu0 0.0
        %1159 = vmatprep.subr.mxu0 0.0
        %1160 = vmatpush1.msra.mxu0 0.0
        %1161 = vmatprep.subr.mxu0 0.0
        %1162 = vmatpush1.msra.mxu0 0.0
        %1163 = vmatprep.subr.mxu0 0.0
        %1164 = vmatpush1.msra.mxu0 0.0
        %1165 = vmatprep.subr.mxu0 0.0
        %1166 = vmatpush1.msra.mxu0 0.0
        %1167 = vmatprep.subr.mxu0 0.0
        %1168 = vmatpush1.msra.mxu0 0.0
        %1169 = vmatprep.subr.mxu0 0.0
        %1170 = vmatpush1.msra.mxu0 0.0
        %1171 = vmatprep.subr.mxu0 0.0
        %1172 = vmatpush1.msra.mxu0 0.0
        %1173 = vmatprep.subr.mxu0 0.0
        %1174 = vmatpush1.msra.mxu0 0.0
        %1175 = vmatprep.subr.mxu0 0.0
        %1176 = vmatpush1.msra.mxu0 0.0
        %1177 = vmatprep.subr.mxu0 0.0
        %1178 = vmatpush1.msra.mxu0 0.0
        %1179 = vmatprep.subr.mxu0 0.0
        %1180 = vmatpush1.msra.mxu0 0.0
        %1181 = vmatprep.subr.mxu0 0.0
        %1182 = vmatpush1.msra.mxu0 0.0
        %1183 = vmatprep.subr.mxu0 0.0
        %1184 = vmatpush1.msra.mxu0 0.0
        %1185 = vmatprep.subr.mxu0 0.0
        %1186 = vmatpush1.msra.mxu0 0.0
        %1187 = vmatprep.subr.mxu0 0.0
        %1188 = vmatpush1.msra.mxu0 0.0
        %1189 = vmatprep.subr.mxu0 0.0
        %1190 = vmatpush1.msra.mxu0 0.0
        %1191 = vmatprep.subr.mxu0 0.0
        %1192 = vmatpush1.msra.mxu0 0.0
        %1193 = vmatprep.subr.mxu0 0.0
        %1194 = vmatpush1.msra.mxu0 0.0
        %1195 = vmatprep.subr.mxu0 0.0
        %1196 = vmatpush1.msra.mxu0 0.0
        %1197 = vmatprep.subr.mxu0 0.0
        %1198 = vmatpush1.msra.mxu0 0.0
        %1199 = vmatprep.subr.mxu0 0.0
        %1200 = vmatpush1.msra.mxu0 0.0
        %1201 = vmatprep.subr.mxu0 0.0
        %1202 = vmatpush1.msra.mxu0 0.0
        %1203 = vmatprep.subr.mxu0 0.0
        %1204 = vmatpush1.msra.mxu0 0.0
        %1205 = vmatprep.subr.mxu0 0.0
        %1206 = vmatpush1.msra.mxu0 0.0
        %1207 = vmatprep.subr.mxu0 0.0
        %1208 = vmatpush1.msra.mxu0 0.0
        %1209 = vmatprep.mubr.f32.mxu0 0.0
        %1210 = vmatmul.mubr.f32.gmra.mrb[0].mxu0 %v1143
        %v1211 = vpop.f32.mrb[0].mxu0
        %v1212 = vadd.f32 0.0, %v1211
        %v1213 = vpop.f32.mrb[0].mxu0
        %1214 = vdwg.mxu0
        %v1215 = vld [vmem:[#allocation5 + $0x8] sm:$0xff]
        %v1217 = vsel %vm556, %v1136, 0
        %v1220 = vsel %vm556, %v1212, 0
        %1222 = vmatprep.subr.mxu0 0.0
        %1223 = vmatpush1.msra.mxu0 %v1215
        %1224 = vmatprep.subr.mxu0 0.0
        %1225 = vmatpush1.msra.mxu0 0.0
        %1226 = vmatprep.subr.mxu0 0.0
        %1227 = vmatpush1.msra.mxu0 0.0
        %1228 = vmatprep.subr.mxu0 0.0
        %1229 = vmatpush1.msra.mxu0 0.0
        %1230 = vmatprep.subr.mxu0 0.0
        %1231 = vmatpush1.msra.mxu0 0.0
        %1232 = vmatprep.subr.mxu0 0.0
        %1233 = vmatpush1.msra.mxu0 0.0
        %1234 = vmatprep.subr.mxu0 0.0
        %1235 = vmatpush1.msra.mxu0 0.0
        %1236 = vmatprep.subr.mxu0 0.0
        %1237 = vmatpush1.msra.mxu0 0.0
        %1238 = vmatprep.subr.mxu0 0.0
        %1239 = vmatpush1.msra.mxu0 0.0
        %1240 = vmatprep.subr.mxu0 0.0
        %1241 = vmatpush1.msra.mxu0 0.0
        %1242 = vmatprep.subr.mxu0 0.0
        %1243 = vmatpush1.msra.mxu0 0.0
        %1244 = vmatprep.subr.mxu0 0.0
        %1245 = vmatpush1.msra.mxu0 0.0
        %1246 = vmatprep.subr.mxu0 0.0
        %1247 = vmatpush1.msra.mxu0 0.0
        %1248 = vmatprep.subr.mxu0 0.0
        %1249 = vmatpush1.msra.mxu0 0.0
        %1250 = vmatprep.subr.mxu0 0.0
        %1251 = vmatpush1.msra.mxu0 0.0
        %1252 = vmatprep.subr.mxu0 0.0
        %1253 = vmatpush1.msra.mxu0 0.0
        %1254 = vmatprep.subr.mxu0 0.0
        %1255 = vmatpush1.msra.mxu0 0.0
        %1256 = vmatprep.subr.mxu0 0.0
        %1257 = vmatpush1.msra.mxu0 0.0
        %1258 = vmatprep.subr.mxu0 0.0
        %1259 = vmatpush1.msra.mxu0 0.0
        %1260 = vmatprep.subr.mxu0 0.0
        %1261 = vmatpush1.msra.mxu0 0.0
        %1262 = vmatprep.subr.mxu0 0.0
        %1263 = vmatpush1.msra.mxu0 0.0
        %1264 = vmatprep.subr.mxu0 0.0
        %1265 = vmatpush1.msra.mxu0 0.0
        %1266 = vmatprep.subr.mxu0 0.0
        %1267 = vmatpush1.msra.mxu0 0.0
        %1268 = vmatprep.subr.mxu0 0.0
        %1269 = vmatpush1.msra.mxu0 0.0
        %1270 = vmatprep.subr.mxu0 0.0
        %1271 = vmatpush1.msra.mxu0 0.0
        %1272 = vmatprep.subr.mxu0 0.0
        %1273 = vmatpush1.msra.mxu0 0.0
        %1274 = vmatprep.subr.mxu0 0.0
        %1275 = vmatpush1.msra.mxu0 0.0
        %1276 = vmatprep.subr.mxu0 0.0
        %1277 = vmatpush1.msra.mxu0 0.0
        %1278 = vmatprep.subr.mxu0 0.0
        %1279 = vmatpush1.msra.mxu0 0.0
        %1280 = vmatprep.subr.mxu0 0.0
        %1281 = vmatpush1.msra.mxu0 0.0
        %1282 = vmatprep.subr.mxu0 0.0
        %1283 = vmatpush1.msra.mxu0 0.0
        %1284 = vmatprep.subr.mxu0 0.0
        %1285 = vmatpush1.msra.mxu0 0.0
        %1286 = vmatprep.mubr.f32.mxu0 0.0
        %1287 = vmatmul.mubr.f32.gmra.mrb[0].mxu0 %v1217
        %v1288 = vpop.f32.mrb[0].mxu0
        %v1289 = vadd.f32 0.0, %v1288
        %v1290 = vpop.f32.mrb[0].mxu0
        %1291 = vmatprep.mubr.f32.mxu0 0.0
        %1292 = vmatmul.mubr.f32.gmra.mrb[0].mxu0 %v1220
        %v1293 = vpop.f32.mrb[0].mxu0
        %v1294 = vadd.f32 0.0, %v1293
        %v1295 = vpop.f32.mrb[0].mxu0
        %1296 = vdwg.mxu0
        %v1298 = vsel %vm556, %v805, 0
        %v1301 = vsel %vm556, %v881, 0
        %1303 = vmatprep.subr.mxu0 0.0
        %1304 = vmatpush1.msra.mxu0 %v884
        %1305 = vmatprep.subr.mxu0 0.0
        %1306 = vmatpush1.msra.mxu0 0.0
        %1307 = vmatprep.subr.mxu0 0.0
        %1308 = vmatpush1.msra.mxu0 0.0
        %1309 = vmatprep.subr.mxu0 0.0
        %1310 = vmatpush1.msra.mxu0 0.0
        %1311 = vmatprep.subr.mxu0 0.0
        %1312 = vmatpush1.msra.mxu0 0.0
        %1313 = vmatprep.subr.mxu0 0.0
        %1314 = vmatpush1.msra.mxu0 0.0
        %1315 = vmatprep.subr.mxu0 0.0
        %1316 = vmatpush1.msra.mxu0 0.0
        %1317 = vmatprep.subr.mxu0 0.0
        %1318 = vmatpush1.msra.mxu0 0.0
        %1319 = vmatprep.subr.mxu0 0.0
        %1320 = vmatpush1.msra.mxu0 0.0
        %1321 = vmatprep.subr.mxu0 0.0
        %1322 = vmatpush1.msra.mxu0 0.0
        %1323 = vmatprep.subr.mxu0 0.0
        %1324 = vmatpush1.msra.mxu0 0.0
        %1325 = vmatprep.subr.mxu0 0.0
        %1326 = vmatpush1.msra.mxu0 0.0
        %1327 = vmatprep.subr.mxu0 0.0
        %1328 = vmatpush1.msra.mxu0 0.0
        %1329 = vmatprep.subr.mxu0 0.0
        %1330 = vmatpush1.msra.mxu0 0.0
        %1331 = vmatprep.subr.mxu0 0.0
        %1332 = vmatpush1.msra.mxu0 0.0
        %1333 = vmatprep.subr.mxu0 0.0
        %1334 = vmatpush1.msra.mxu0 0.0
        %1335 = vmatprep.subr.mxu0 0.0
        %1336 = vmatpush1.msra.mxu0 0.0
        %1337 = vmatprep.subr.mxu0 0.0
        %1338 = vmatpush1.msra.mxu0 0.0
        %1339 = vmatprep.subr.mxu0 0.0
        %1340 = vmatpush1.msra.mxu0 0.0
        %1341 = vmatprep.subr.mxu0 0.0
        %1342 = vmatpush1.msra.mxu0 0.0
        %1343 = vmatprep.subr.mxu0 0.0
        %1344 = vmatpush1.msra.mxu0 0.0
        %1345 = vmatprep.subr.mxu0 0.0
        %1346 = vmatpush1.msra.mxu0 0.0
        %1347 = vmatprep.subr.mxu0 0.0
        %1348 = vmatpush1.msra.mxu0 0.0
        %1349 = vmatprep.subr.mxu0 0.0
        %1350 = vmatpush1.msra.mxu0 0.0
        %1351 = vmatprep.subr.mxu0 0.0
        %1352 = vmatpush1.msra.mxu0 0.0
        %1353 = vmatprep.subr.mxu0 0.0
        %1354 = vmatpush1.msra.mxu0 0.0
        %1355 = vmatprep.subr.mxu0 0.0
        %1356 = vmatpush1.msra.mxu0 0.0
        %1357 = vmatprep.subr.mxu0 0.0
        %1358 = vmatpush1.msra.mxu0 0.0
        %1359 = vmatprep.subr.mxu0 0.0
        %1360 = vmatpush1.msra.mxu0 0.0
        %1361 = vmatprep.subr.mxu0 0.0
        %1362 = vmatpush1.msra.mxu0 0.0
        %1363 = vmatprep.subr.mxu0 0.0
        %1364 = vmatpush1.msra.mxu0 0.0
        %1365 = vmatprep.subr.mxu0 0.0
        %1366 = vmatpush1.msra.mxu0 0.0
        %1367 = vmatprep.mubr.f32.mxu0 0.0
        %1368 = vmatmul.mubr.f32.gmra.mrb[0].mxu0 %v1298
        %v1369 = vpop.f32.mrb[0].mxu0
        %v1370 = vadd.f32 %v1289, %v1369
        %v1371 = vpop.f32.mrb[0].mxu0
        %1372 = vmatprep.mubr.f32.mxu0 0.0
        %1373 = vmatmul.mubr.f32.gmra.mrb[0].mxu0 %v1301
        %v1374 = vpop.f32.mrb[0].mxu0
        %v1375 = vadd.f32 %v1294, %v1374
        %v1376 = vpop.f32.mrb[0].mxu0
        %1377 = vdwg.mxu0
        %1378 = vrot.lane.b32.xlu0 %v551, 112
        %v1379 = vpop.permute.xlu0 %1378
        %1380 = vrot.lane.b32.xlu0 %v543, 80
        %v1381 = vpop.permute.xlu0 %1380
        %v1382 = vsel %vm556, %v1379, 0
        %v1384 = vsel %vm556, %v1381, 0
        %1386 = vmatprep.subr.mxu0 0.0
        %1387 = vmatpush1.xpose.msra.mxu0 %v1384
        %1388 = vmatprep.subr.mxu0 0.0
        %1389 = vmatpush1.xpose.msra.mxu0 0.0
        %1390 = vmatprep.subr.mxu0 0.0
        %1391 = vmatpush1.xpose.msra.mxu0 0.0
        %1392 = vmatprep.subr.mxu0 0.0
        %1393 = vmatpush1.xpose.msra.mxu0 0.0
        %1394 = vmatprep.subr.mxu0 0.0
        %1395 = vmatpush1.xpose.msra.mxu0 0.0
        %1396 = vmatprep.subr.mxu0 0.0
        %1397 = vmatpush1.xpose.msra.mxu0 0.0
        %1398 = vmatprep.subr.mxu0 0.0
        %1399 = vmatpush1.xpose.msra.mxu0 0.0
        %1400 = vmatprep.subr.mxu0 0.0
        %1401 = vmatpush1.xpose.msra.mxu0 0.0
        %1402 = vmatprep.subr.mxu0 0.0
        %1403 = vmatpush1.xpose.msra.mxu0 0.0
        %1404 = vmatprep.subr.mxu0 0.0
        %1405 = vmatpush1.xpose.msra.mxu0 0.0
        %1406 = vmatprep.subr.mxu0 0.0
        %1407 = vmatpush1.xpose.msra.mxu0 0.0
        %1408 = vmatprep.subr.mxu0 0.0
        %1409 = vmatpush1.xpose.msra.mxu0 0.0
        %1410 = vmatprep.subr.mxu0 0.0
        %1411 = vmatpush1.xpose.msra.mxu0 0.0
        %1412 = vmatprep.subr.mxu0 0.0
        %1413 = vmatpush1.xpose.msra.mxu0 0.0
        %1414 = vmatprep.subr.mxu0 0.0
        %1415 = vmatpush1.xpose.msra.mxu0 0.0
        %1416 = vmatprep.subr.mxu0 0.0
        %1417 = vmatpush1.xpose.msra.mxu0 0.0
        %1418 = vmatprep.subr.mxu0 0.0
        %1419 = vmatpush1.xpose.msra.mxu0 0.0
        %1420 = vmatprep.subr.mxu0 0.0
        %1421 = vmatpush1.xpose.msra.mxu0 0.0
        %1422 = vmatprep.subr.mxu0 0.0
        %1423 = vmatpush1.xpose.msra.mxu0 0.0
        %1424 = vmatprep.subr.mxu0 0.0
        %1425 = vmatpush1.xpose.msra.mxu0 0.0
        %1426 = vmatprep.subr.mxu0 0.0
        %1427 = vmatpush1.xpose.msra.mxu0 0.0
        %1428 = vmatprep.subr.mxu0 0.0
        %1429 = vmatpush1.xpose.msra.mxu0 0.0
        %1430 = vmatprep.subr.mxu0 0.0
        %1431 = vmatpush1.xpose.msra.mxu0 0.0
        %1432 = vmatprep.subr.mxu0 0.0
        %1433 = vmatpush1.xpose.msra.mxu0 0.0
        %1434 = vmatprep.subr.mxu0 0.0
        %1435 = vmatpush1.xpose.msra.mxu0 0.0
        %1436 = vmatprep.subr.mxu0 0.0
        %1437 = vmatpush1.xpose.msra.mxu0 0.0
        %1438 = vmatprep.subr.mxu0 0.0
        %1439 = vmatpush1.xpose.msra.mxu0 0.0
        %1440 = vmatprep.subr.mxu0 0.0
        %1441 = vmatpush1.xpose.msra.mxu0 0.0
        %1442 = vmatprep.subr.mxu0 0.0
        %1443 = vmatpush1.xpose.msra.mxu0 0.0
        %1444 = vmatprep.subr.mxu0 0.0
        %1445 = vmatpush1.xpose.msra.mxu0 0.0
        %1446 = vmatprep.subr.mxu0 0.0
        %1447 = vmatpush1.xpose.msra.mxu0 0.0
        %1448 = vmatprep.subr.mxu0 0.0
        %1449 = vmatpush1.xpose.msra.mxu0 0.0
        %1450 = vmatprep.mubr.f32.mxu0 0.0
        %1451 = vmatmul.mubr.f32.gmra.mrb[0].mxu0 %v1382
        %v1452 = vpop.f32.mrb[0].mxu0
        %v1453 = vadd.f32 0.0, %v1452
        %v1454 = vpop.f32.mrb[0].mxu0
        %1455 = vdwg.mxu0
        %1456 = vrot.lane.b32.xlu0 %v552, 112
        %v1457 = vpop.permute.xlu0 %1456
        %1458 = vrot.lane.b32.xlu0 %v548, 80
        %v1459 = vpop.permute.xlu0 %1458
        %v1460 = vsel %vm556, %v1457, 0
        %v1462 = vsel %vm556, %v1459, 0
        %1464 = vmatprep.subr.mxu0 0.0
        %1465 = vmatpush1.xpose.msra.mxu0 %v1462
        %1466 = vmatprep.subr.mxu0 0.0
        %1467 = vmatpush1.xpose.msra.mxu0 0.0
        %1468 = vmatprep.subr.mxu0 0.0
        %1469 = vmatpush1.xpose.msra.mxu0 0.0
        %1470 = vmatprep.subr.mxu0 0.0
        %1471 = vmatpush1.xpose.msra.mxu0 0.0
        %1472 = vmatprep.subr.mxu0 0.0
        %1473 = vmatpush1.xpose.msra.mxu0 0.0
        %1474 = vmatprep.subr.mxu0 0.0
        %1475 = vmatpush1.xpose.msra.mxu0 0.0
        %1476 = vmatprep.subr.mxu0 0.0
        %1477 = vmatpush1.xpose.msra.mxu0 0.0
        %1478 = vmatprep.subr.mxu0 0.0
        %1479 = vmatpush1.xpose.msra.mxu0 0.0
        %1480 = vmatprep.subr.mxu0 0.0
        %1481 = vmatpush1.xpose.msra.mxu0 0.0
        %1482 = vmatprep.subr.mxu0 0.0
        %1483 = vmatpush1.xpose.msra.mxu0 0.0
        %1484 = vmatprep.subr.mxu0 0.0
        %1485 = vmatpush1.xpose.msra.mxu0 0.0
        %1486 = vmatprep.subr.mxu0 0.0
        %1487 = vmatpush1.xpose.msra.mxu0 0.0
        %1488 = vmatprep.subr.mxu0 0.0
        %1489 = vmatpush1.xpose.msra.mxu0 0.0
        %1490 = vmatprep.subr.mxu0 0.0
        %1491 = vmatpush1.xpose.msra.mxu0 0.0
        %1492 = vmatprep.subr.mxu0 0.0
        %1493 = vmatpush1.xpose.msra.mxu0 0.0
        %1494 = vmatprep.subr.mxu0 0.0
        %1495 = vmatpush1.xpose.msra.mxu0 0.0
        %1496 = vmatprep.subr.mxu0 0.0
        %1497 = vmatpush1.xpose.msra.mxu0 0.0
        %1498 = vmatprep.subr.mxu0 0.0
        %1499 = vmatpush1.xpose.msra.mxu0 0.0
        %1500 = vmatprep.subr.mxu0 0.0
        %1501 = vmatpush1.xpose.msra.mxu0 0.0
        %1502 = vmatprep.subr.mxu0 0.0
        %1503 = vmatpush1.xpose.msra.mxu0 0.0
        %1504 = vmatprep.subr.mxu0 0.0
        %1505 = vmatpush1.xpose.msra.mxu0 0.0
        %1506 = vmatprep.subr.mxu0 0.0
        %1507 = vmatpush1.xpose.msra.mxu0 0.0
        %1508 = vmatprep.subr.mxu0 0.0
        %1509 = vmatpush1.xpose.msra.mxu0 0.0
        %1510 = vmatprep.subr.mxu0 0.0
        %1511 = vmatpush1.xpose.msra.mxu0 0.0
        %1512 = vmatprep.subr.mxu0 0.0
        %1513 = vmatpush1.xpose.msra.mxu0 0.0
        %1514 = vmatprep.subr.mxu0 0.0
        %1515 = vmatpush1.xpose.msra.mxu0 0.0
        %1516 = vmatprep.subr.mxu0 0.0
        %1517 = vmatpush1.xpose.msra.mxu0 0.0
        %1518 = vmatprep.subr.mxu0 0.0
        %1519 = vmatpush1.xpose.msra.mxu0 0.0
        %1520 = vmatprep.subr.mxu0 0.0
        %1521 = vmatpush1.xpose.msra.mxu0 0.0
        %1522 = vmatprep.subr.mxu0 0.0
        %1523 = vmatpush1.xpose.msra.mxu0 0.0
        %1524 = vmatprep.subr.mxu0 0.0
        %1525 = vmatpush1.xpose.msra.mxu0 0.0
        %1526 = vmatprep.subr.mxu0 0.0
        %1527 = vmatpush1.xpose.msra.mxu0 0.0
        %1528 = vmatprep.mubr.f32.mxu0 0.0
        %1529 = vmatmul.mubr.f32.gmra.mrb[0].mxu0 %v1460
        %v1530 = vpop.f32.mrb[0].mxu0
        %v1531 = vadd.f32 0.0, %v1530
        %v1532 = vpop.f32.mrb[0].mxu0
        %1533 = vdwg.mxu0
        %v1534 = vsel %vm556, %v1453, -inf
        %1535 = vmax.xlane.f32.xlu0 %v1534
        %v1536 = vpop.xlane.xlu0 %1535
        %v1537 = vsel %vm556, %v1531, -inf
        %1538 = vmax.xlane.f32.xlu0 %v1537
        %v1539 = vpop.xlane.xlu0 %1538
        %v1540 = vsub.f32 %v1453, %v1536
        %v1541 = vsub.f32 %v1531, %v1539
        %v1542 = vmul.f32 %v1540, 1.442695
        %v1543 = vpow.pop %v1542
        %v1544 = vmul.f32 %v1541, 1.442695
        %v1545 = vpow.pop %v1544
        %v1546 = vsel %vm556, %v1543, 0.0
        %1547 = vadd.xlane.f32.xlu0 %v1546
        %v1548 = vpop.xlane.xlu0 %1547
        %v1549 = vsel %vm556, %v1545, 0.0
        %1550 = vadd.xlane.f32.xlu0 %v1549
        %v1551 = vpop.xlane.xlu0 %1550
        %v1552 = vrcp.pop %v1548
        %v1553 = vrcp.pop %v1551
        %v1554 = vmul.f32 %v1543, %v1552
        %v1555 = vmul.f32 %v1545, %v1553
        %1556 = vrot.lane.b32.xlu0 %v543, 48
        %v1557 = vpop.permute.xlu0 %1556
        %v1560 = vsel %vm556, %v1554, 0
        %1562 = vmatprep.subr.mxu0 0.0
        %1563 = vmatpush1.msra.mxu0 %v1557
        %1564 = vmatprep.subr.mxu0 0.0
        %1565 = vmatpush1.msra.mxu0 0.0
        %1566 = vmatprep.subr.mxu0 0.0
        %1567 = vmatpush1.msra.mxu0 0.0
        %1568 = vmatprep.subr.mxu0 0.0
        %1569 = vmatpush1.msra.mxu0 0.0
        %1570 = vmatprep.subr.mxu0 0.0
        %1571 = vmatpush1.msra.mxu0 0.0
        %1572 = vmatprep.subr.mxu0 0.0
        %1573 = vmatpush1.msra.mxu0 0.0
        %1574 = vmatprep.subr.mxu0 0.0
        %1575 = vmatpush1.msra.mxu0 0.0
        %1576 = vmatprep.subr.mxu0 0.0
        %1577 = vmatpush1.msra.mxu0 0.0
        %1578 = vmatprep.subr.mxu0 0.0
        %1579 = vmatpush1.msra.mxu0 0.0
        %1580 = vmatprep.subr.mxu0 0.0
        %1581 = vmatpush1.msra.mxu0 0.0
        %1582 = vmatprep.subr.mxu0 0.0
        %1583 = vmatpush1.msra.mxu0 0.0
        %1584 = vmatprep.subr.mxu0 0.0
        %1585 = vmatpush1.msra.mxu0 0.0
        %1586 = vmatprep.subr.mxu0 0.0
        %1587 = vmatpush1.msra.mxu0 0.0
        %1588 = vmatprep.subr.mxu0 0.0
        %1589 = vmatpush1.msra.mxu0 0.0
        %1590 = vmatprep.subr.mxu0 0.0
        %1591 = vmatpush1.msra.mxu0 0.0
        %1592 = vmatprep.subr.mxu0 0.0
        %1593 = vmatpush1.msra.mxu0 0.0
        %1594 = vmatprep.subr.mxu0 0.0
        %1595 = vmatpush1.msra.mxu0 0.0
        %1596 = vmatprep.subr.mxu0 0.0
        %1597 = vmatpush1.msra.mxu0 0.0
        %1598 = vmatprep.subr.mxu0 0.0
        %1599 = vmatpush1.msra.mxu0 0.0
        %1600 = vmatprep.subr.mxu0 0.0
        %1601 = vmatpush1.msra.mxu0 0.0
        %1602 = vmatprep.subr.mxu0 0.0
        %1603 = vmatpush1.msra.mxu0 0.0
        %1604 = vmatprep.subr.mxu0 0.0
        %1605 = vmatpush1.msra.mxu0 0.0
        %1606 = vmatprep.subr.mxu0 0.0
        %1607 = vmatpush1.msra.mxu0 0.0
        %1608 = vmatprep.subr.mxu0 0.0
        %1609 = vmatpush1.msra.mxu0 0.0
        %1610 = vmatprep.subr.mxu0 0.0
        %1611 = vmatpush1.msra.mxu0 0.0
        %1612 = vmatprep.subr.mxu0 0.0
        %1613 = vmatpush1.msra.mxu0 0.0
        %1614 = vmatprep.subr.mxu0 0.0
        %1615 = vmatpush1.msra.mxu0 0.0
        %1616 = vmatprep.subr.mxu0 0.0
        %1617 = vmatpush1.msra.mxu0 0.0
        %1618 = vmatprep.subr.mxu0 0.0
        %1619 = vmatpush1.msra.mxu0 0.0
        %1620 = vmatprep.subr.mxu0 0.0
        %1621 = vmatpush1.msra.mxu0 0.0
        %1622 = vmatprep.subr.mxu0 0.0
        %1623 = vmatpush1.msra.mxu0 0.0
        %1624 = vmatprep.subr.mxu0 0.0
        %1625 = vmatpush1.msra.mxu0 0.0
        %1626 = vmatprep.mubr.f32.mxu0 0.0
        %1627 = vmatmul.mubr.f32.gmra.mrb[0].mxu0 %v1560
        %v1628 = vpop.f32.mrb[0].mxu0
        %v1629 = vadd.f32 0.0, %v1628
        %v1630 = vpop.f32.mrb[0].mxu0
        %1631 = vdwg.mxu0
        %1632 = vrot.lane.b32.xlu0 %v548, 48
        %v1633 = vpop.permute.xlu0 %1632
        %v1636 = vsel %vm556, %v1555, 0
        %1638 = vmatprep.subr.mxu0 0.0
        %1639 = vmatpush1.msra.mxu0 %v1633
        %1640 = vmatprep.subr.mxu0 0.0
        %1641 = vmatpush1.msra.mxu0 0.0
        %1642 = vmatprep.subr.mxu0 0.0
        %1643 = vmatpush1.msra.mxu0 0.0
        %1644 = vmatprep.subr.mxu0 0.0
        %1645 = vmatpush1.msra.mxu0 0.0
        %1646 = vmatprep.subr.mxu0 0.0
        %1647 = vmatpush1.msra.mxu0 0.0
        %1648 = vmatprep.subr.mxu0 0.0
        %1649 = vmatpush1.msra.mxu0 0.0
        %1650 = vmatprep.subr.mxu0 0.0
        %1651 = vmatpush1.msra.mxu0 0.0
        %1652 = vmatprep.subr.mxu0 0.0
        %1653 = vmatpush1.msra.mxu0 0.0
        %1654 = vmatprep.subr.mxu0 0.0
        %1655 = vmatpush1.msra.mxu0 0.0
        %1656 = vmatprep.subr.mxu0 0.0
        %1657 = vmatpush1.msra.mxu0 0.0
        %1658 = vmatprep.subr.mxu0 0.0
        %1659 = vmatpush1.msra.mxu0 0.0
        %1660 = vmatprep.subr.mxu0 0.0
        %1661 = vmatpush1.msra.mxu0 0.0
        %1662 = vmatprep.subr.mxu0 0.0
        %1663 = vmatpush1.msra.mxu0 0.0
        %1664 = vmatprep.subr.mxu0 0.0
        %1665 = vmatpush1.msra.mxu0 0.0
        %1666 = vmatprep.subr.mxu0 0.0
        %1667 = vmatpush1.msra.mxu0 0.0
        %1668 = vmatprep.subr.mxu0 0.0
        %1669 = vmatpush1.msra.mxu0 0.0
        %1670 = vmatprep.subr.mxu0 0.0
        %1671 = vmatpush1.msra.mxu0 0.0
        %1672 = vmatprep.subr.mxu0 0.0
        %1673 = vmatpush1.msra.mxu0 0.0
        %1674 = vmatprep.subr.mxu0 0.0
        %1675 = vmatpush1.msra.mxu0 0.0
        %1676 = vmatprep.subr.mxu0 0.0
        %1677 = vmatpush1.msra.mxu0 0.0
        %1678 = vmatprep.subr.mxu0 0.0
        %1679 = vmatpush1.msra.mxu0 0.0
        %1680 = vmatprep.subr.mxu0 0.0
        %1681 = vmatpush1.msra.mxu0 0.0
        %1682 = vmatprep.subr.mxu0 0.0
        %1683 = vmatpush1.msra.mxu0 0.0
        %1684 = vmatprep.subr.mxu0 0.0
        %1685 = vmatpush1.msra.mxu0 0.0
        %1686 = vmatprep.subr.mxu0 0.0
        %1687 = vmatpush1.msra.mxu0 0.0
        %1688 = vmatprep.subr.mxu0 0.0
        %1689 = vmatpush1.msra.mxu0 0.0
        %1690 = vmatprep.subr.mxu0 0.0
        %1691 = vmatpush1.msra.mxu0 0.0
        %1692 = vmatprep.subr.mxu0 0.0
        %1693 = vmatpush1.msra.mxu0 0.0
        %1694 = vmatprep.subr.mxu0 0.0
        %1695 = vmatpush1.msra.mxu0 0.0
        %1696 = vmatprep.subr.mxu0 0.0
        %1697 = vmatpush1.msra.mxu0 0.0
        %1698 = vmatprep.subr.mxu0 0.0
        %1699 = vmatpush1.msra.mxu0 0.0
        %1700 = vmatprep.subr.mxu0 0.0
        %1701 = vmatpush1.msra.mxu0 0.0
        %1702 = vmatprep.mubr.f32.mxu0 0.0
        %1703 = vmatmul.mubr.f32.gmra.mrb[0].mxu0 %v1636
        %v1704 = vpop.f32.mrb[0].mxu0
        %v1705 = vadd.f32 0.0, %v1704
        %v1706 = vpop.f32.mrb[0].mxu0
        %1707 = vdwg.mxu0
        %v1708 = vld [vmem:[#allocation5 + $0x10] sm:$0xff]
        %v1710 = vsel %vm556, %v1629, 0
        %v1713 = vsel %vm556, %v1705, 0
        %1715 = vmatprep.subr.mxu0 0.0
        %1716 = vmatpush1.msra.mxu0 %v1708
        %1717 = vmatprep.subr.mxu0 0.0
        %1718 = vmatpush1.msra.mxu0 0.0
        %1719 = vmatprep.subr.mxu0 0.0
        %1720 = vmatpush1.msra.mxu0 0.0
        %1721 = vmatprep.subr.mxu0 0.0
        %1722 = vmatpush1.msra.mxu0 0.0
        %1723 = vmatprep.subr.mxu0 0.0
        %1724 = vmatpush1.msra.mxu0 0.0
        %1725 = vmatprep.subr.mxu0 0.0
        %1726 = vmatpush1.msra.mxu0 0.0
        %1727 = vmatprep.subr.mxu0 0.0
        %1728 = vmatpush1.msra.mxu0 0.0
        %1729 = vmatprep.subr.mxu0 0.0
        %1730 = vmatpush1.msra.mxu0 0.0
        %1731 = vmatprep.subr.mxu0 0.0
        %1732 = vmatpush1.msra.mxu0 0.0
        %1733 = vmatprep.subr.mxu0 0.0
        %1734 = vmatpush1.msra.mxu0 0.0
        %1735 = vmatprep.subr.mxu0 0.0
        %1736 = vmatpush1.msra.mxu0 0.0
        %1737 = vmatprep.subr.mxu0 0.0
        %1738 = vmatpush1.msra.mxu0 0.0
        %1739 = vmatprep.subr.mxu0 0.0
        %1740 = vmatpush1.msra.mxu0 0.0
        %1741 = vmatprep.subr.mxu0 0.0
        %1742 = vmatpush1.msra.mxu0 0.0
        %1743 = vmatprep.subr.mxu0 0.0
        %1744 = vmatpush1.msra.mxu0 0.0
        %1745 = vmatprep.subr.mxu0 0.0
        %1746 = vmatpush1.msra.mxu0 0.0
        %1747 = vmatprep.subr.mxu0 0.0
        %1748 = vmatpush1.msra.mxu0 0.0
        %1749 = vmatprep.subr.mxu0 0.0
        %1750 = vmatpush1.msra.mxu0 0.0
        %1751 = vmatprep.subr.mxu0 0.0
        %1752 = vmatpush1.msra.mxu0 0.0
        %1753 = vmatprep.subr.mxu0 0.0
        %1754 = vmatpush1.msra.mxu0 0.0
        %1755 = vmatprep.subr.mxu0 0.0
        %1756 = vmatpush1.msra.mxu0 0.0
        %1757 = vmatprep.subr.mxu0 0.0
        %1758 = vmatpush1.msra.mxu0 0.0
        %1759 = vmatprep.subr.mxu0 0.0
        %1760 = vmatpush1.msra.mxu0 0.0
        %1761 = vmatprep.subr.mxu0 0.0
        %1762 = vmatpush1.msra.mxu0 0.0
        %1763 = vmatprep.subr.mxu0 0.0
        %1764 = vmatpush1.msra.mxu0 0.0
        %1765 = vmatprep.subr.mxu0 0.0
        %1766 = vmatpush1.msra.mxu0 0.0
        %1767 = vmatprep.subr.mxu0 0.0
        %1768 = vmatpush1.msra.mxu0 0.0
        %1769 = vmatprep.subr.mxu0 0.0
        %1770 = vmatpush1.msra.mxu0 0.0
        %1771 = vmatprep.subr.mxu0 0.0
        %1772 = vmatpush1.msra.mxu0 0.0
        %1773 = vmatprep.subr.mxu0 0.0
        %1774 = vmatpush1.msra.mxu0 0.0
        %1775 = vmatprep.subr.mxu0 0.0
        %1776 = vmatpush1.msra.mxu0 0.0
        %1777 = vmatprep.subr.mxu0 0.0
        %1778 = vmatpush1.msra.mxu0 0.0
        %1779 = vmatprep.mubr.f32.mxu0 0.0
        %1780 = vmatmul.mubr.f32.gmra.mrb[0].mxu0 %v1710
        %v1781 = vpop.f32.mrb[0].mxu0
        %v1782 = vadd.f32 0.0, %v1781
        %v1783 = vpop.f32.mrb[0].mxu0
        %1784 = vmatprep.mubr.f32.mxu0 0.0
        %1785 = vmatmul.mubr.f32.gmra.mrb[0].mxu0 %v1713
        %v1786 = vpop.f32.mrb[0].mxu0
        %v1787 = vadd.f32 0.0, %v1786
        %v1788 = vpop.f32.mrb[0].mxu0
        %1789 = vdwg.mxu0
        %v1790 = vadd.f32 %v1370, %v1782
        %v1791 = vadd.f32 %v1375, %v1787
        %1792 = vrot.lane.b32.xlu0 %v551, 104
        %v1793 = vpop.permute.xlu0 %1792
        %1794 = vrot.lane.b32.xlu0 %v543, 72
        %v1795 = vpop.permute.xlu0 %1794
        %v1796 = vsel %vm556, %v1793, 0
        %v1798 = vsel %vm556, %v1795, 0
        %1800 = vmatprep.subr.mxu0 0.0
        %1801 = vmatpush1.xpose.msra.mxu0 %v1798
        %1802 = vmatprep.subr.mxu0 0.0
        %1803 = vmatpush1.xpose.msra.mxu0 0.0
        %1804 = vmatprep.subr.mxu0 0.0
        %1805 = vmatpush1.xpose.msra.mxu0 0.0
        %1806 = vmatprep.subr.mxu0 0.0
        %1807 = vmatpush1.xpose.msra.mxu0 0.0
        %1808 = vmatprep.subr.mxu0 0.0
        %1809 = vmatpush1.xpose.msra.mxu0 0.0
        %1810 = vmatprep.subr.mxu0 0.0
        %1811 = vmatpush1.xpose.msra.mxu0 0.0
        %1812 = vmatprep.subr.mxu0 0.0
        %1813 = vmatpush1.xpose.msra.mxu0 0.0
        %1814 = vmatprep.subr.mxu0 0.0
        %1815 = vmatpush1.xpose.msra.mxu0 0.0
        %1816 = vmatprep.subr.mxu0 0.0
        %1817 = vmatpush1.xpose.msra.mxu0 0.0
        %1818 = vmatprep.subr.mxu0 0.0
        %1819 = vmatpush1.xpose.msra.mxu0 0.0
        %1820 = vmatprep.subr.mxu0 0.0
        %1821 = vmatpush1.xpose.msra.mxu0 0.0
        %1822 = vmatprep.subr.mxu0 0.0
        %1823 = vmatpush1.xpose.msra.mxu0 0.0
        %1824 = vmatprep.subr.mxu0 0.0
        %1825 = vmatpush1.xpose.msra.mxu0 0.0
        %1826 = vmatprep.subr.mxu0 0.0
        %1827 = vmatpush1.xpose.msra.mxu0 0.0
        %1828 = vmatprep.subr.mxu0 0.0
        %1829 = vmatpush1.xpose.msra.mxu0 0.0
        %1830 = vmatprep.subr.mxu0 0.0
        %1831 = vmatpush1.xpose.msra.mxu0 0.0
        %1832 = vmatprep.subr.mxu0 0.0
        %1833 = vmatpush1.xpose.msra.mxu0 0.0
        %1834 = vmatprep.subr.mxu0 0.0
        %1835 = vmatpush1.xpose.msra.mxu0 0.0
        %1836 = vmatprep.subr.mxu0 0.0
        %1837 = vmatpush1.xpose.msra.mxu0 0.0
        %1838 = vmatprep.subr.mxu0 0.0
        %1839 = vmatpush1.xpose.msra.mxu0 0.0
        %1840 = vmatprep.subr.mxu0 0.0
        %1841 = vmatpush1.xpose.msra.mxu0 0.0
        %1842 = vmatprep.subr.mxu0 0.0
        %1843 = vmatpush1.xpose.msra.mxu0 0.0
        %1844 = vmatprep.subr.mxu0 0.0
        %1845 = vmatpush1.xpose.msra.mxu0 0.0
        %1846 = vmatprep.subr.mxu0 0.0
        %1847 = vmatpush1.xpose.msra.mxu0 0.0
        %1848 = vmatprep.subr.mxu0 0.0
        %1849 = vmatpush1.xpose.msra.mxu0 0.0
        %1850 = vmatprep.subr.mxu0 0.0
        %1851 = vmatpush1.xpose.msra.mxu0 0.0
        %1852 = vmatprep.subr.mxu0 0.0
        %1853 = vmatpush1.xpose.msra.mxu0 0.0
        %1854 = vmatprep.subr.mxu0 0.0
        %1855 = vmatpush1.xpose.msra.mxu0 0.0
        %1856 = vmatprep.subr.mxu0 0.0
        %1857 = vmatpush1.xpose.msra.mxu0 0.0
        %1858 = vmatprep.subr.mxu0 0.0
        %1859 = vmatpush1.xpose.msra.mxu0 0.0
        %1860 = vmatprep.subr.mxu0 0.0
        %1861 = vmatpush1.xpose.msra.mxu0 0.0
        %1862 = vmatprep.subr.mxu0 0.0
        %1863 = vmatpush1.xpose.msra.mxu0 0.0
        %1864 = vmatprep.mubr.f32.mxu0 0.0
        %1865 = vmatmul.mubr.f32.gmra.mrb[0].mxu0 %v1796
        %v1866 = vpop.f32.mrb[0].mxu0
        %v1867 = vadd.f32 0.0, %v1866
        %v1868 = vpop.f32.mrb[0].mxu0
        %1869 = vdwg.mxu0
        %1870 = vrot.lane.b32.xlu0 %v552, 104
        %v1871 = vpop.permute.xlu0 %1870
        %1872 = vrot.lane.b32.xlu0 %v548, 72
        %v1873 = vpop.permute.xlu0 %1872
        %v1874 = vsel %vm556, %v1871, 0
        %v1876 = vsel %vm556, %v1873, 0
        %1878 = vmatprep.subr.mxu0 0.0
        %1879 = vmatpush1.xpose.msra.mxu0 %v1876
        %1880 = vmatprep.subr.mxu0 0.0
        %1881 = vmatpush1.xpose.msra.mxu0 0.0
        %1882 = vmatprep.subr.mxu0 0.0
        %1883 = vmatpush1.xpose.msra.mxu0 0.0
        %1884 = vmatprep.subr.mxu0 0.0
        %1885 = vmatpush1.xpose.msra.mxu0 0.0
        %1886 = vmatprep.subr.mxu0 0.0
        %1887 = vmatpush1.xpose.msra.mxu0 0.0
        %1888 = vmatprep.subr.mxu0 0.0
        %1889 = vmatpush1.xpose.msra.mxu0 0.0
        %1890 = vmatprep.subr.mxu0 0.0
        %1891 = vmatpush1.xpose.msra.mxu0 0.0
        %1892 = vmatprep.subr.mxu0 0.0
        %1893 = vmatpush1.xpose.msra.mxu0 0.0
        %1894 = vmatprep.subr.mxu0 0.0
        %1895 = vmatpush1.xpose.msra.mxu0 0.0
        %1896 = vmatprep.subr.mxu0 0.0
        %1897 = vmatpush1.xpose.msra.mxu0 0.0
        %1898 = vmatprep.subr.mxu0 0.0
        %1899 = vmatpush1.xpose.msra.mxu0 0.0
        %1900 = vmatprep.subr.mxu0 0.0
        %1901 = vmatpush1.xpose.msra.mxu0 0.0
        %1902 = vmatprep.subr.mxu0 0.0
        %1903 = vmatpush1.xpose.msra.mxu0 0.0
        %1904 = vmatprep.subr.mxu0 0.0
        %1905 = vmatpush1.xpose.msra.mxu0 0.0
        %1906 = vmatprep.subr.mxu0 0.0
        %1907 = vmatpush1.xpose.msra.mxu0 0.0
        %1908 = vmatprep.subr.mxu0 0.0
        %1909 = vmatpush1.xpose.msra.mxu0 0.0
        %1910 = vmatprep.subr.mxu0 0.0
        %1911 = vmatpush1.xpose.msra.mxu0 0.0
        %1912 = vmatprep.subr.mxu0 0.0
        %1913 = vmatpush1.xpose.msra.mxu0 0.0
        %1914 = vmatprep.subr.mxu0 0.0
        %1915 = vmatpush1.xpose.msra.mxu0 0.0
        %1916 = vmatprep.subr.mxu0 0.0
        %1917 = vmatpush1.xpose.msra.mxu0 0.0
        %1918 = vmatprep.subr.mxu0 0.0
        %1919 = vmatpush1.xpose.msra.mxu0 0.0
        %1920 = vmatprep.subr.mxu0 0.0
        %1921 = vmatpush1.xpose.msra.mxu0 0.0
        %1922 = vmatprep.subr.mxu0 0.0
        %1923 = vmatpush1.xpose.msra.mxu0 0.0
        %1924 = vmatprep.subr.mxu0 0.0
        %1925 = vmatpush1.xpose.msra.mxu0 0.0
        %1926 = vmatprep.subr.mxu0 0.0
        %1927 = vmatpush1.xpose.msra.mxu0 0.0
        %1928 = vmatprep.subr.mxu0 0.0
        %1929 = vmatpush1.xpose.msra.mxu0 0.0
        %1930 = vmatprep.subr.mxu0 0.0
        %1931 = vmatpush1.xpose.msra.mxu0 0.0
        %1932 = vmatprep.subr.mxu0 0.0
        %1933 = vmatpush1.xpose.msra.mxu0 0.0
        %1934 = vmatprep.subr.mxu0 0.0
        %1935 = vmatpush1.xpose.msra.mxu0 0.0
        %1936 = vmatprep.subr.mxu0 0.0
        %1937 = vmatpush1.xpose.msra.mxu0 0.0
        %1938 = vmatprep.subr.mxu0 0.0
        %1939 = vmatpush1.xpose.msra.mxu0 0.0
        %1940 = vmatprep.subr.mxu0 0.0
        %1941 = vmatpush1.xpose.msra.mxu0 0.0
        %1942 = vmatprep.mubr.f32.mxu0 0.0
        %1943 = vmatmul.mubr.f32.gmra.mrb[0].mxu0 %v1874
        %v1944 = vpop.f32.mrb[0].mxu0
        %v1945 = vadd.f32 0.0, %v1944
        %v1946 = vpop.f32.mrb[0].mxu0
        %1947 = vdwg.mxu0
        %v1948 = vsel %vm556, %v1867, -inf
        %1949 = vmax.xlane.f32.xlu0 %v1948
        %v1950 = vpop.xlane.xlu0 %1949
        %v1951 = vsel %vm556, %v1945, -inf
        %1952 = vmax.xlane.f32.xlu0 %v1951
        %v1953 = vpop.xlane.xlu0 %1952
        %v1954 = vsub.f32 %v1867, %v1950
        %v1955 = vsub.f32 %v1945, %v1953
        %v1956 = vmul.f32 %v1954, 1.442695
        %v1957 = vpow.pop %v1956
        %v1958 = vmul.f32 %v1955, 1.442695
        %v1959 = vpow.pop %v1958
        %v1960 = vsel %vm556, %v1957, 0.0
        %1961 = vadd.xlane.f32.xlu0 %v1960
        %v1962 = vpop.xlane.xlu0 %1961
        %v1963 = vsel %vm556, %v1959, 0.0
        %1964 = vadd.xlane.f32.xlu0 %v1963
        %v1965 = vpop.xlane.xlu0 %1964
        %v1966 = vrcp.pop %v1962
        %v1967 = vrcp.pop %v1965
        %v1968 = vmul.f32 %v1957, %v1966
        %v1969 = vmul.f32 %v1959, %v1967
        %1970 = vrot.lane.b32.xlu0 %v543, 40
        %v1971 = vpop.permute.xlu0 %1970
        %v1974 = vsel %vm556, %v1968, 0
        %1976 = vmatprep.subr.mxu0 0.0
        %1977 = vmatpush1.msra.mxu0 %v1971
        %1978 = vmatprep.subr.mxu0 0.0
        %1979 = vmatpush1.msra.mxu0 0.0
        %1980 = vmatprep.subr.mxu0 0.0
        %1981 = vmatpush1.msra.mxu0 0.0
        %1982 = vmatprep.subr.mxu0 0.0
        %1983 = vmatpush1.msra.mxu0 0.0
        %1984 = vmatprep.subr.mxu0 0.0
        %1985 = vmatpush1.msra.mxu0 0.0
        %1986 = vmatprep.subr.mxu0 0.0
        %1987 = vmatpush1.msra.mxu0 0.0
        %1988 = vmatprep.subr.mxu0 0.0
        %1989 = vmatpush1.msra.mxu0 0.0
        %1990 = vmatprep.subr.mxu0 0.0
        %1991 = vmatpush1.msra.mxu0 0.0
        %1992 = vmatprep.subr.mxu0 0.0
        %1993 = vmatpush1.msra.mxu0 0.0
        %1994 = vmatprep.subr.mxu0 0.0
        %1995 = vmatpush1.msra.mxu0 0.0
        %1996 = vmatprep.subr.mxu0 0.0
        %1997 = vmatpush1.msra.mxu0 0.0
        %1998 = vmatprep.subr.mxu0 0.0
        %1999 = vmatpush1.msra.mxu0 0.0
        %2000 = vmatprep.subr.mxu0 0.0
        %2001 = vmatpush1.msra.mxu0 0.0
        %2002 = vmatprep.subr.mxu0 0.0
        %2003 = vmatpush1.msra.mxu0 0.0
        %2004 = vmatprep.subr.mxu0 0.0
        %2005 = vmatpush1.msra.mxu0 0.0
        %2006 = vmatprep.subr.mxu0 0.0
        %2007 = vmatpush1.msra.mxu0 0.0
        %2008 = vmatprep.subr.mxu0 0.0
        %2009 = vmatpush1.msra.mxu0 0.0
        %2010 = vmatprep.subr.mxu0 0.0
        %2011 = vmatpush1.msra.mxu0 0.0
        %2012 = vmatprep.subr.mxu0 0.0
        %2013 = vmatpush1.msra.mxu0 0.0
        %2014 = vmatprep.subr.mxu0 0.0
        %2015 = vmatpush1.msra.mxu0 0.0
        %2016 = vmatprep.subr.mxu0 0.0
        %2017 = vmatpush1.msra.mxu0 0.0
        %2018 = vmatprep.subr.mxu0 0.0
        %2019 = vmatpush1.msra.mxu0 0.0
        %2020 = vmatprep.subr.mxu0 0.0
        %2021 = vmatpush1.msra.mxu0 0.0
        %2022 = vmatprep.subr.mxu0 0.0
        %2023 = vmatpush1.msra.mxu0 0.0
        %2024 = vmatprep.subr.mxu0 0.0
        %2025 = vmatpush1.msra.mxu0 0.0
        %2026 = vmatprep.subr.mxu0 0.0
        %2027 = vmatpush1.msra.mxu0 0.0
        %2028 = vmatprep.subr.mxu0 0.0
        %2029 = vmatpush1.msra.mxu0 0.0
        %2030 = vmatprep.subr.mxu0 0.0
        %2031 = vmatpush1.msra.mxu0 0.0
        %2032 = vmatprep.subr.mxu0 0.0
        %2033 = vmatpush1.msra.mxu0 0.0
        %2034 = vmatprep.subr.mxu0 0.0
        %2035 = vmatpush1.msra.mxu0 0.0
        %2036 = vmatprep.subr.mxu0 0.0
        %2037 = vmatpush1.msra.mxu0 0.0
        %2038 = vmatprep.subr.mxu0 0.0
        %2039 = vmatpush1.msra.mxu0 0.0
        %2040 = vmatprep.mubr.f32.mxu0 0.0
        %2041 = vmatmul.mubr.f32.gmra.mrb[0].mxu0 %v1974
        %v2042 = vpop.f32.mrb[0].mxu0
        %v2043 = vadd.f32 0.0, %v2042
        %v2044 = vpop.f32.mrb[0].mxu0
        %2045 = vdwg.mxu0
        %2046 = vrot.lane.b32.xlu0 %v548, 40
        %v2047 = vpop.permute.xlu0 %2046
        %v2050 = vsel %vm556, %v1969, 0
        %2052 = vmatprep.subr.mxu0 0.0
        %2053 = vmatpush1.msra.mxu0 %v2047
        %2054 = vmatprep.subr.mxu0 0.0
        %2055 = vmatpush1.msra.mxu0 0.0
        %2056 = vmatprep.subr.mxu0 0.0
        %2057 = vmatpush1.msra.mxu0 0.0
        %2058 = vmatprep.subr.mxu0 0.0
        %2059 = vmatpush1.msra.mxu0 0.0
        %2060 = vmatprep.subr.mxu0 0.0
        %2061 = vmatpush1.msra.mxu0 0.0
        %2062 = vmatprep.subr.mxu0 0.0
        %2063 = vmatpush1.msra.mxu0 0.0
        %2064 = vmatprep.subr.mxu0 0.0
        %2065 = vmatpush1.msra.mxu0 0.0
        %2066 = vmatprep.subr.mxu0 0.0
        %2067 = vmatpush1.msra.mxu0 0.0
        %2068 = vmatprep.subr.mxu0 0.0
        %2069 = vmatpush1.msra.mxu0 0.0
        %2070 = vmatprep.subr.mxu0 0.0
        %2071 = vmatpush1.msra.mxu0 0.0
        %2072 = vmatprep.subr.mxu0 0.0
        %2073 = vmatpush1.msra.mxu0 0.0
        %2074 = vmatprep.subr.mxu0 0.0
        %2075 = vmatpush1.msra.mxu0 0.0
        %2076 = vmatprep.subr.mxu0 0.0
        %2077 = vmatpush1.msra.mxu0 0.0
        %2078 = vmatprep.subr.mxu0 0.0
        %2079 = vmatpush1.msra.mxu0 0.0
        %2080 = vmatprep.subr.mxu0 0.0
        %2081 = vmatpush1.msra.mxu0 0.0
        %2082 = vmatprep.subr.mxu0 0.0
        %2083 = vmatpush1.msra.mxu0 0.0
        %2084 = vmatprep.subr.mxu0 0.0
        %2085 = vmatpush1.msra.mxu0 0.0
        %2086 = vmatprep.subr.mxu0 0.0
        %2087 = vmatpush1.msra.mxu0 0.0
        %2088 = vmatprep.subr.mxu0 0.0
        %2089 = vmatpush1.msra.mxu0 0.0
        %2090 = vmatprep.subr.mxu0 0.0
        %2091 = vmatpush1.msra.mxu0 0.0
        %2092 = vmatprep.subr.mxu0 0.0
        %2093 = vmatpush1.msra.mxu0 0.0
        %2094 = vmatprep.subr.mxu0 0.0
        %2095 = vmatpush1.msra.mxu0 0.0
        %2096 = vmatprep.subr.mxu0 0.0
        %2097 = vmatpush1.msra.mxu0 0.0
        %2098 = vmatprep.subr.mxu0 0.0
        %2099 = vmatpush1.msra.mxu0 0.0
        %2100 = vmatprep.subr.mxu0 0.0
        %2101 = vmatpush1.msra.mxu0 0.0
        %2102 = vmatprep.subr.mxu0 0.0
        %2103 = vmatpush1.msra.mxu0 0.0
        %2104 = vmatprep.subr.mxu0 0.0
        %2105 = vmatpush1.msra.mxu0 0.0
        %2106 = vmatprep.subr.mxu0 0.0
        %2107 = vmatpush1.msra.mxu0 0.0
        %2108 = vmatprep.subr.mxu0 0.0
        %2109 = vmatpush1.msra.mxu0 0.0
        %2110 = vmatprep.subr.mxu0 0.0
        %2111 = vmatpush1.msra.mxu0 0.0
        %2112 = vmatprep.subr.mxu0 0.0
        %2113 = vmatpush1.msra.mxu0 0.0
        %2114 = vmatprep.subr.mxu0 0.0
        %2115 = vmatpush1.msra.mxu0 0.0
        %2116 = vmatprep.mubr.f32.mxu0 0.0
        %2117 = vmatmul.mubr.f32.gmra.mrb[0].mxu0 %v2050
        %v2118 = vpop.f32.mrb[0].mxu0
        %v2119 = vadd.f32 0.0, %v2118
        %v2120 = vpop.f32.mrb[0].mxu0
        %2121 = vdwg.mxu0
        %v2122 = vld [vmem:[#allocation5 + $0x18] sm:$0xff]
        %v2124 = vsel %vm556, %v2043, 0
        %v2127 = vsel %vm556, %v2119, 0
        %2129 = vmatprep.subr.mxu0 0.0
        %2130 = vmatpush1.msra.mxu0 %v2122
        %2131 = vmatprep.subr.mxu0 0.0
        %2132 = vmatpush1.msra.mxu0 0.0
        %2133 = vmatprep.subr.mxu0 0.0
        %2134 = vmatpush1.msra.mxu0 0.0
        %2135 = vmatprep.subr.mxu0 0.0
        %2136 = vmatpush1.msra.mxu0 0.0
        %2137 = vmatprep.subr.mxu0 0.0
        %2138 = vmatpush1.msra.mxu0 0.0
        %2139 = vmatprep.subr.mxu0 0.0
        %2140 = vmatpush1.msra.mxu0 0.0
        %2141 = vmatprep.subr.mxu0 0.0
        %2142 = vmatpush1.msra.mxu0 0.0
        %2143 = vmatprep.subr.mxu0 0.0
        %2144 = vmatpush1.msra.mxu0 0.0
        %2145 = vmatprep.subr.mxu0 0.0
        %2146 = vmatpush1.msra.mxu0 0.0
        %2147 = vmatprep.subr.mxu0 0.0
        %2148 = vmatpush1.msra.mxu0 0.0
        %2149 = vmatprep.subr.mxu0 0.0
        %2150 = vmatpush1.msra.mxu0 0.0
        %2151 = vmatprep.subr.mxu0 0.0
        %2152 = vmatpush1.msra.mxu0 0.0
        %2153 = vmatprep.subr.mxu0 0.0
        %2154 = vmatpush1.msra.mxu0 0.0
        %2155 = vmatprep.subr.mxu0 0.0
        %2156 = vmatpush1.msra.mxu0 0.0
        %2157 = vmatprep.subr.mxu0 0.0
        %2158 = vmatpush1.msra.mxu0 0.0
        %2159 = vmatprep.subr.mxu0 0.0
        %2160 = vmatpush1.msra.mxu0 0.0
        %2161 = vmatprep.subr.mxu0 0.0
        %2162 = vmatpush1.msra.mxu0 0.0
        %2163 = vmatprep.subr.mxu0 0.0
        %2164 = vmatpush1.msra.mxu0 0.0
        %2165 = vmatprep.subr.mxu0 0.0
        %2166 = vmatpush1.msra.mxu0 0.0
        %2167 = vmatprep.subr.mxu0 0.0
        %2168 = vmatpush1.msra.mxu0 0.0
        %2169 = vmatprep.subr.mxu0 0.0
        %2170 = vmatpush1.msra.mxu0 0.0
        %2171 = vmatprep.subr.mxu0 0.0
        %2172 = vmatpush1.msra.mxu0 0.0
        %2173 = vmatprep.subr.mxu0 0.0
        %2174 = vmatpush1.msra.mxu0 0.0
        %2175 = vmatprep.subr.mxu0 0.0
        %2176 = vmatpush1.msra.mxu0 0.0
        %2177 = vmatprep.subr.mxu0 0.0
        %2178 = vmatpush1.msra.mxu0 0.0
        %2179 = vmatprep.subr.mxu0 0.0
        %2180 = vmatpush1.msra.mxu0 0.0
        %2181 = vmatprep.subr.mxu0 0.0
        %2182 = vmatpush1.msra.mxu0 0.0
        %2183 = vmatprep.subr.mxu0 0.0
        %2184 = vmatpush1.msra.mxu0 0.0
        %2185 = vmatprep.subr.mxu0 0.0
        %2186 = vmatpush1.msra.mxu0 0.0
        %2187 = vmatprep.subr.mxu0 0.0
        %2188 = vmatpush1.msra.mxu0 0.0
        %2189 = vmatprep.subr.mxu0 0.0
        %2190 = vmatpush1.msra.mxu0 0.0
        %2191 = vmatprep.subr.mxu0 0.0
        %2192 = vmatpush1.msra.mxu0 0.0
        %2193 = vmatprep.mubr.f32.mxu0 0.0
        %2194 = vmatmul.mubr.f32.gmra.mrb[0].mxu0 %v2124
        %v2195 = vpop.f32.mrb[0].mxu0
        %v2196 = vadd.f32 0.0, %v2195
        %v2197 = vpop.f32.mrb[0].mxu0
        %2198 = vmatprep.mubr.f32.mxu0 0.0
        %2199 = vmatmul.mubr.f32.gmra.mrb[0].mxu0 %v2127
        %v2200 = vpop.f32.mrb[0].mxu0
        %v2201 = vadd.f32 0.0, %v2200
        %v2202 = vpop.f32.mrb[0].mxu0
        %2203 = vdwg.mxu0
        %v2204 = vadd.f32 %v1790, %v2196
        %v2205 = vadd.f32 %v1791, %v2201
        %v2206 = vadd.f32 %v418, %v2204
        %v2207 = vadd.f32 %v419, %v2205
        %v2208 = vsel %vm420, %v2206, 0.0
        %2209 = vadd.xlane.f32.xlu0 %v2208
        %v2210 = vpop.xlane.xlu0 %2209
        %v2211 = vsel %vm420, %v2207, 0.0
        %2212 = vadd.xlane.f32.xlu0 %v2211
        %v2213 = vpop.xlane.xlu0 %2212
        %v2214 = vmul.f32 %v2210, %v427
        %v2215 = vmul.f32 %v2213, %v427
        %v2216 = vsub.f32 %v2206, %v2214
        %v2217 = vsub.f32 %v2207, %v2215
        %v2218 = vmul.f32 %v2216, %v2216
        %v2219 = vmul.f32 %v2217, %v2217
        %v2220 = vsel %vm420, %v2218, 0.0
        %2221 = vadd.xlane.f32.xlu0 %v2220
        %v2222 = vpop.xlane.xlu0 %2221
        %v2223 = vsel %vm420, %v2219, 0.0
        %2224 = vadd.xlane.f32.xlu0 %v2223
        %v2225 = vpop.xlane.xlu0 %2224
        %v2226 = vmul.f32 %v2222, %v427
        %v2227 = vmul.f32 %v2225, %v427
        %v2228 = vadd.f32 %v2226, 1e-05
        %v2229 = vadd.f32 %v2227, 1e-05
        %v2230 = vrsqrt.pop %v2228
        %v2231 = vrsqrt.pop %v2229
        %v2232 = vmul.f32 %v2216, %v2230
        %v2233 = vmul.f32 %v2217, %v2231
        %v2234 = vld [vmem:[%s5] sm:$0x1]
        %v2236 = vlaneseq
        %v2237 = vshrl.u32 %v2236, 7
        %v2238 = vsub.s32 0, %v2237
        %v2239 = vrot.slane %v2234, %v2238
        %v2241 = vmul.f32 %v2232, %v2239
        %v2242 = vmul.f32 %v2233, %v2239
        %v2243 = vld [vmem:[%s6] sm:$0x1]
        %v2245 = vlaneseq
        %v2246 = vshrl.u32 %v2245, 7
        %v2247 = vsub.s32 0, %v2246
        %v2248 = vrot.slane %v2243, %v2247
        %v2250 = vadd.f32 %v2241, %v2248
        %v2251 = vadd.f32 %v2242, %v2248
        %v2252 = vld [vmem:[%s7] sm:$0xff]
        %v2253 = vld [vmem:[%s7 + $0x8] sm:$0xff]
        %v2254 = vld [vmem:[%s7 + $0x10] sm:$0xff]
        %v2255 = vld [vmem:[%s7 + $0x18] sm:$0xff]
        %v2256 = vld [vmem:[%s8] sm:$0x1]
        %v2258 = vlaneseq
        %v2259 = vshrl.u32 %v2258, 7
        %v2260 = vsub.s32 0, %v2259
        %v2261 = vrot.slane %v2256, %v2260
        %v2264 = vsel %vm420, %v2250, 0
        %v2267 = vsel %vm420, %v2251, 0
        %2269 = vmatprep.subr.mxu0 0.0
        %2270 = vmatpush1.msra.mxu0 %v2252
        %2271 = vmatprep.subr.mxu0 0.0
        %2272 = vmatpush1.msra.mxu0 %v2253
        %2273 = vmatprep.subr.mxu0 0.0
        %2274 = vmatpush1.msra.mxu0 %v2254
        %2275 = vmatprep.subr.mxu0 0.0
        %2276 = vmatpush1.msra.mxu0 %v2255
        %2277 = vmatprep.subr.mxu0 0.0
        %2278 = vmatpush1.msra.mxu0 0.0
        %2279 = vmatprep.subr.mxu0 0.0
        %2280 = vmatpush1.msra.mxu0 0.0
        %2281 = vmatprep.subr.mxu0 0.0
        %2282 = vmatpush1.msra.mxu0 0.0
        %2283 = vmatprep.subr.mxu0 0.0
        %2284 = vmatpush1.msra.mxu0 0.0
        %2285 = vmatprep.subr.mxu0 0.0
        %2286 = vmatpush1.msra.mxu0 0.0
        %2287 = vmatprep.subr.mxu0 0.0
        %2288 = vmatpush1.msra.mxu0 0.0
        %2289 = vmatprep.subr.mxu0 0.0
        %2290 = vmatpush1.msra.mxu0 0.0
        %2291 = vmatprep.subr.mxu0 0.0
        %2292 = vmatpush1.msra.mxu0 0.0
        %2293 = vmatprep.subr.mxu0 0.0
        %2294 = vmatpush1.msra.mxu0 0.0
        %2295 = vmatprep.subr.mxu0 0.0
        %2296 = vmatpush1.msra.mxu0 0.0
        %2297 = vmatprep.subr.mxu0 0.0
        %2298 = vmatpush1.msra.mxu0 0.0
        %2299 = vmatprep.subr.mxu0 0.0
        %2300 = vmatpush1.msra.mxu0 0.0
        %2301 = vmatprep.subr.mxu0 0.0
        %2302 = vmatpush1.msra.mxu0 0.0
        %2303 = vmatprep.subr.mxu0 0.0
        %2304 = vmatpush1.msra.mxu0 0.0
        %2305 = vmatprep.subr.mxu0 0.0
        %2306 = vmatpush1.msra.mxu0 0.0
        %2307 = vmatprep.subr.mxu0 0.0
        %2308 = vmatpush1.msra.mxu0 0.0
        %2309 = vmatprep.subr.mxu0 0.0
        %2310 = vmatpush1.msra.mxu0 0.0
        %2311 = vmatprep.subr.mxu0 0.0
        %2312 = vmatpush1.msra.mxu0 0.0
        %2313 = vmatprep.subr.mxu0 0.0
        %2314 = vmatpush1.msra.mxu0 0.0
        %2315 = vmatprep.subr.mxu0 0.0
        %2316 = vmatpush1.msra.mxu0 0.0
        %2317 = vmatprep.subr.mxu0 0.0
        %2318 = vmatpush1.msra.mxu0 0.0
        %2319 = vmatprep.subr.mxu0 0.0
        %2320 = vmatpush1.msra.mxu0 0.0
        %2321 = vmatprep.subr.mxu0 0.0
        %2322 = vmatpush1.msra.mxu0 0.0
        %2323 = vmatprep.subr.mxu0 0.0
        %2324 = vmatpush1.msra.mxu0 0.0
        %2325 = vmatprep.subr.mxu0 0.0
        %2326 = vmatpush1.msra.mxu0 0.0
        %2327 = vmatprep.subr.mxu0 0.0
        %2328 = vmatpush1.msra.mxu0 0.0
        %2329 = vmatprep.subr.mxu0 0.0
        %2330 = vmatpush1.msra.mxu0 0.0
        %2331 = vmatprep.subr.mxu0 0.0
        %2332 = vmatpush1.msra.mxu0 0.0
        %2333 = vmatprep.mubr.f32.mxu0 0.0
        %2334 = vmatmul.mubr.f32.gmra.mrb[0].mxu0 %v2264
        %v2335 = vpop.f32.mrb[0].mxu0
        %v2336 = vadd.f32 %v2261, %v2335
        %v2337 = vpop.f32.mrb[0].mxu0
        %2338 = vmatprep.mubr.f32.mxu0 0.0
        %2339 = vmatmul.mubr.f32.gmra.mrb[0].mxu0 %v2267
        %v2340 = vpop.f32.mrb[0].mxu0
        %v2341 = vadd.f32 %v2261, %v2340
        %v2342 = vpop.f32.mrb[0].mxu0
        %2343 = vdwg.mxu0
        %v2344 = vmul.f32 %v2336, 0.5
        %v2345 = vmul.f32 %v2341, 0.5
        %v2346 = vrcp.pop 1.4142135
        %v2347 = vmul.f32 %v2336, %v2346
        %v2348 = vmul.f32 %v2341, %v2346
        %v2349 = verf.f32.pop %v2347
        %v2350 = verf.f32.pop %v2348
        %v2351 = vadd.f32 %v2349, 1.0
        %v2352 = vadd.f32 %v2350, 1.0
        %v2353 = vmul.f32 %v2344, %v2351
        %v2354 = vmul.f32 %v2345, %v2352
        %v2355 = vld [vmem:[%s9] sm:$0xff]
        %v2356 = vld [vmem:[%s9 + $0x8] sm:$0xff]
        %v2357 = vld [vmem:[%s10] sm:$0x1]
        %v2359 = vlaneseq
        %v2360 = vshrl.u32 %v2359, 7
        %v2361 = vsub.s32 0, %v2360
        %v2362 = vrot.slane %v2357, %v2361
        %vm2364 = vcmask 130048
        %v2366 = vsel %vm2364, %v2353, 0
        %v2369 = vsel %vm2364, %v2354, 0
        %2371 = vmatprep.subr.mxu0 0.0
        %2372 = vmatpush1.msra.mxu0 %v2355
        %2373 = vmatprep.subr.mxu0 0.0
        %2374 = vmatpush1.msra.mxu0 %v2356
        %2375 = vmatprep.subr.mxu0 0.0
        %2376 = vmatpush1.msra.mxu0 0.0
        %2377 = vmatprep.subr.mxu0 0.0
        %2378 = vmatpush1.msra.mxu0 0.0
        %2379 = vmatprep.subr.mxu0 0.0
        %2380 = vmatpush1.msra.mxu0 0.0
        %2381 = vmatprep.subr.mxu0 0.0
        %2382 = vmatpush1.msra.mxu0 0.0
        %2383 = vmatprep.subr.mxu0 0.0
        %2384 = vmatpush1.msra.mxu0 0.0
        %2385 = vmatprep.subr.mxu0 0.0
        %2386 = vmatpush1.msra.mxu0 0.0
        %2387 = vmatprep.subr.mxu0 0.0
        %2388 = vmatpush1.msra.mxu0 0.0
        %2389 = vmatprep.subr.mxu0 0.0
        %2390 = vmatpush1.msra.mxu0 0.0
        %2391 = vmatprep.subr.mxu0 0.0
        %2392 = vmatpush1.msra.mxu0 0.0
        %2393 = vmatprep.subr.mxu0 0.0
        %2394 = vmatpush1.msra.mxu0 0.0
        %2395 = vmatprep.subr.mxu0 0.0
        %2396 = vmatpush1.msra.mxu0 0.0
        %2397 = vmatprep.subr.mxu0 0.0
        %2398 = vmatpush1.msra.mxu0 0.0
        %2399 = vmatprep.subr.mxu0 0.0
        %2400 = vmatpush1.msra.mxu0 0.0
        %2401 = vmatprep.subr.mxu0 0.0
        %2402 = vmatpush1.msra.mxu0 0.0
        %2403 = vmatprep.subr.mxu0 0.0
        %2404 = vmatpush1.msra.mxu0 0.0
        %2405 = vmatprep.subr.mxu0 0.0
        %2406 = vmatpush1.msra.mxu0 0.0
        %2407 = vmatprep.subr.mxu0 0.0
        %2408 = vmatpush1.msra.mxu0 0.0
        %2409 = vmatprep.subr.mxu0 0.0
        %2410 = vmatpush1.msra.mxu0 0.0
        %2411 = vmatprep.subr.mxu0 0.0
        %2412 = vmatpush1.msra.mxu0 0.0
        %2413 = vmatprep.subr.mxu0 0.0
        %2414 = vmatpush1.msra.mxu0 0.0
        %2415 = vmatprep.subr.mxu0 0.0
        %2416 = vmatpush1.msra.mxu0 0.0
        %2417 = vmatprep.subr.mxu0 0.0
        %2418 = vmatpush1.msra.mxu0 0.0
        %2419 = vmatprep.subr.mxu0 0.0
        %2420 = vmatpush1.msra.mxu0 0.0
        %2421 = vmatprep.subr.mxu0 0.0
        %2422 = vmatpush1.msra.mxu0 0.0
        %2423 = vmatprep.subr.mxu0 0.0
        %2424 = vmatpush1.msra.mxu0 0.0
        %2425 = vmatprep.subr.mxu0 0.0
        %2426 = vmatpush1.msra.mxu0 0.0
        %2427 = vmatprep.subr.mxu0 0.0
        %2428 = vmatpush1.msra.mxu0 0.0
        %2429 = vmatprep.subr.mxu0 0.0
        %2430 = vmatpush1.msra.mxu0 0.0
        %2431 = vmatprep.subr.mxu0 0.0
        %2432 = vmatpush1.msra.mxu0 0.0
        %2433 = vmatprep.subr.mxu0 0.0
        %2434 = vmatpush1.msra.mxu0 0.0
        %2435 = vmatprep.mubr.f32.mxu0 0.0
        %2436 = vmatmul.mubr.f32.gmra.mrb[0].mxu0 %v2366
        %v2437 = vpop.f32.mrb[0].mxu0
        %v2438 = vadd.f32 %v2362, %v2437
        %v2439 = vpop.f32.mrb[0].mxu0
        %2440 = vmatprep.mubr.f32.mxu0 0.0
        %2441 = vmatmul.mubr.f32.gmra.mrb[0].mxu0 %v2369
        %v2442 = vpop.f32.mrb[0].mxu0
        %v2443 = vadd.f32 %v2362, %v2442
        %v2444 = vpop.f32.mrb[0].mxu0
        %2445 = vdwg.mxu0
        %v2446 = vadd.f32 %v2206, %v2438
        %v2447 = vadd.f32 %v2207, %v2443
        %2448 = vst.msk [vmem:[%s410] sm:$0xff] %vm420, %v2446
        %2449 = vst.msk [vmem:[%s410 + $0x8] sm:$0xff] %vm420, %v2447
        %s2450 = sand.u32 %s271, 1
        %s2451 = scalar_lea.sflag [#allocation4], %s2450
        %s2452 = sand.u32 %s271, 1
        %s2453 = smul.addr %s2452, 16
        %s2454 = scalar_lea.vmem [#allocation7], %s2453
        // Predicated region
        $region73: #{tpu_custom_call.1} parent=63 // pred_check
          %p2455 = pneg %p281
        $region74: #{tpu_custom_call.1} parent=63 // pred_check_branch
          %2457 = sbr.rel (%p2455) target = $region76
        $region75: #{tpu_custom_call.1} parent=63 // pred_region
          %s2458 = smul.u32 2, %s27
          %s2460 = ssub.s32 256, 256
          %2461 = vsyncadd %s2451, %s2460
          %s2462 = smul.addr %s2458, 128
          %s2463 = scalar_lea.hbm %s11, %s2462
          %s2464 = sshll.u32 %s2454, 4
          %s2465 = int_to_ptr.vmem [resolvable:$true] %s2464
          %2470 = dma.vmem_to_hbm [thread:$0]  %s2465, 256, %s2463, %s2451, 128, 128, 8
        $region76: #{tpu_custom_call.1} parent=63 // pred_fallthru
          _
      $region64: #{tpu_custom_call.1} parent=5 // pred_fallthru
        _
      %p2471 = scmp.le.s32.totalorder 2, %s22
      // Predicated region
      $region77: #{tpu_custom_call.1} parent=5 // pred_check
        %p2472 = pneg %p2471
      $region78: #{tpu_custom_call.1} parent=5 // pred_check_branch
        %2474 = sbr.rel (%p2472) target = $region80
      $region79: #{tpu_custom_call.1} parent=5 // pred_region
        %s2475 = ssub.s32 %s22, 2
        // Predicated region
        $region81: #{tpu_custom_call.1} parent=79 // pred_check
          %p2476 = pneg %p287
        $region82: #{tpu_custom_call.1} parent=79 // pred_check_branch
          %2478 = sbr.rel (%p2476) target = $region84
        $region83: #{tpu_custom_call.1} parent=79 // pred_region
          %s2479 = sand.u32 %s272, 1
          %s2480 = scalar_lea.sflag [#allocation4], %s2479
          %s2481 = sand.u32 %s272, 1
          %s2482 = smul.addr %s2481, 16
          %s2483 = scalar_lea.vmem [#allocation7], %s2482
          %2484 = dma.done %s2480, 256
        $region84: #{tpu_custom_call.1} parent=79 // pred_fallthru
          _
      $region80: #{tpu_custom_call.1} parent=5 // pred_fallthru
        _
    $region6: #{tpu_custom_call.1} parent=1 // loop_footer
      %s26 = sadd.s32 1, %s22
    $region7: #{tpu_custom_call.1} parent=1 // loop_footer_branch
      %21 = sbr.rel target = $region3
    $region8: #{tpu_custom_call.1} parent=1 // loop_exit
      _
    %2485 = vsyncpa [#allocation3], 1
    %s2486 = scalar_lea.sflag [#allocation3], 1
    %2487 = vsyncpa %s2486, 1
    %2488 = vsyncpa [#allocation6], 1
    %2489 = vsyncpa [#allocation4], 1
    %s2490 = scalar_lea.sflag [#allocation4], 1
    %2491 = vsyncpa %s2490, 1

</llo_original>
